<compile_context>
chip_gen: v7x
topology: tpu7x:2x2x1
jax: 0.10.0
libtpu: 0.0.40
codegen_flags: <defaults>
</compile_context>

<pallas_src>
import functools
from typing import NamedTuple

import numpy as np
import jax
import jax.numpy as jnp
from jax.experimental import pallas as pl
from jax.experimental.pallas import tpu as pltpu


# --------------------------------------------------------------------------------------
# Small helpers
# --------------------------------------------------------------------------------------
def _cdiv(a, b):
    return -(-a // b)


def _round_up(x, m):
    return _cdiv(x, m) * m


def _enlarge_tile(base, n_tiles, target):
    """Largest base*k <= target with k dividing n_tiles (so the tile divides the padded dim)."""
    k_best = 1
    for k in range(2, n_tiles + 1):
        if n_tiles % k == 0 and base * k <= target:
            k_best = k
    return base * k_best


def _vmem_capacity_bytes():
    """Per-core VMEM capacity; conservative v7x fallback if the query is unavailable."""
    try:
        info = pltpu.get_tpu_info()
        cap = getattr(info, "vmem_capacity_bytes", None)
        if cap:
            return int(cap)
    except Exception:
        pass
    return 64 << 20


class MMGeom(NamedTuple):
    H: int
    B: int
    V: int
    V_pad: int
    H_pad: int
    tn: int
    n_vt: int
    row_tile: int
    use_hidden: bool
    compute_dtype: type


# --------------------------------------------------------------------------------------
# Kernels
# --------------------------------------------------------------------------------------
def _pass1_kernel(*refs, use_hidden, add, inv_scale):
    """One (vocab-tile, row-tile) step: z = proj * gate plus online running log-sum-exp."""
    if use_hidden:
        (lhs_ref, oh_ref, wproj_ref, wh2g_ref, blin_ref, psig_ref,
         z_ref, lse_ref, m_sc, l_sc) = refs
    else:
        (lhs_ref, oh_ref, wproj_ref, blin_ref, gate_ref,
         z_ref, lse_ref, m_sc, l_sc) = refs

    j = pl.program_id(0)                  # vocab tile (OUTER: each weight tile DMA'd once)
    i = pl.program_id(1)                  # row tile   (INNER)
    tm = z_ref.shape[0]

    lhs = lhs_ref[...]                    # [tm, H_pad] bf16 hidden rows (zero padded)

    # proj = hidden @ W_lin^T + b_lin   (padded vocab columns carry b_lin = -1e30).
    proj = jnp.dot(lhs, wproj_ref[...], preferred_element_type=jnp.float32) + blin_ref[...]

    if use_hidden:
        # pre_sigmoid rows replicated per time step via the tiny K=B one-hot matmul.
        gate_pre = (jnp.dot(oh_ref[...], psig_ref[...], preferred_element_type=jnp.float32)
                    + jnp.dot(lhs, wh2g_ref[...], preferred_element_type=jnp.float32))
        gate = jax.nn.sigmoid(gate_pre)
        if add != 0.0:                    # skip add/scale entirely when add == 0
            gate = (gate + add) * inv_scale
    else:
        # sigmoid / (+add) / scale precomputed in the wrapper -> no EUP work in this branch.
        gate = jnp.dot(oh_ref[...], gate_ref[...], preferred_element_type=jnp.float32)

    z = proj * gate                       # [tm, tn] f32

    # Online (flash-style) running max / sum-exp, persistent across the OUTER vocab axis.
    rows = pl.ds(pl.multiple_of(i * tm, 8), tm)

    @pl.when(j == 0)
    def _():
        m_sc[rows, :] = jnp.full((tm, 1), -jnp.inf, jnp.float32)
        l_sc[rows, :] = jnp.zeros((tm, 1), jnp.float32)

    m_prev = m_sc[rows, :]
    m_new = jnp.maximum(m_prev, jnp.max(z, axis=-1, keepdims=True))
    l_new = (l_sc[rows, :] * jnp.exp(m_prev - m_new)
             + jnp.sum(jnp.exp(z - m_new), axis=-1, keepdims=True))
    m_sc[rows, :] = m_new
    l_sc[rows, :] = l_new

    z_ref[...] = z.astype(z_ref.dtype)    # bf16 intermediate

    @pl.when(j == pl.num_programs(0) - 1)
    def _():                              # log + store only on the last vocab tile
        lse_ref[...] = m_new + jnp.log(l_new)


def _pass2_kernel(z_ref, lse_ref, out_ref):
    """Lane-dense elementwise normalize: out = z - lse (log_softmax finalize)."""
    out_ref[...] = (z_ref[...].astype(jnp.float32) - lse_ref[...]).astype(out_ref.dtype)


# --------------------------------------------------------------------------------------
# Static (call-invariant) weight preparation
# --------------------------------------------------------------------------------------
def prepare_params(params, batch, *, use_hidden=True, row_tile=512, vocab_tile=None,
                   compute_dtype=jnp.bfloat16):
    """Pad / transpose the weights ONCE; geometry is returned as a hashable NamedTuple."""
    w_lin, b_lin, w_gate, b_gate, w_h2g = params
    V, H = map(int, w_lin.shape)
    B = int(batch)
    cd = compute_dtype
    f32 = jnp.float32

    H_pad = _round_up(H, 128)
    cap = _vmem_capacity_bytes()
    budget = max(int(0.85 * cap), 32 << 20)

    if vocab_tile is None:
        # Widest 128-aligned vocab tile whose double-buffered streamed weight tiles use at most
        # ~half the per-core VMEM budget (capped at 4096 lanes).
        n_w = 2 if use_hidden else 1
        bpe = jnp.dtype(cd).itemsize
        max_tn = (budget // 2) // max(2 * n_w * H_pad * bpe, 1)
        vocab_tile = int(max(512, min(4096, (max_tn // 128) * 128)))

    n_vt = _cdiv(V, int(vocab_tile))
    tn = _round_up(_cdiv(V, n_vt), 128)        # balanced tiles, minimal padding
    V_pad = n_vt * tn

    NEG = -1.0e30   # padded vocab columns: proj = NEG, gate = 1 -> excluded from the softmax

    wproj_aug = jnp.zeros((H_pad, V_pad), f32).at[:H, :V].set(w_lin.astype(f32).T).astype(cd)
    b_row = jnp.pad(b_lin.astype(f32)[None, :], ((0, 0), (0, V_pad - V)), constant_values=NEG)
    if use_hidden:
        wh2g_aug = jnp.zeros((H_pad, V_pad), f32).at[:H, :V].set(
            w_h2g.astype(f32).T).astype(cd)
    else:
        wh2g_aug = None

    weights = (wproj_aug, wh2g_aug, b_row, w_gate.astype(f32), b_gate.astype(f32))
    geom = MMGeom(H=H, B=B, V=V, V_pad=V_pad, H_pad=H_pad, tn=tn, n_vt=n_vt,
                  row_tile=int(row_tile), use_hidden=bool(use_hidden), compute_dtype=cd)
    return weights, geom


# --------------------------------------------------------------------------------------
# Forward wrapper
# --------------------------------------------------------------------------------------
def multimodal_generator(hidden, img_feats, weights, *, geom, n_time, add=0.0,
                         use_hidden=True, out_dtype=jnp.float32):
    """hidden: [N, H] with N = n_time * batch (row order t*batch + b); img_feats: [batch, F]."""
    wproj_aug, wh2g_aug, b_row, w_gate, b_gate = weights
    g = geom
    f32 = jnp.float32
    cd = g.compute_dtype
    N, H = hidden.shape
    B, F = img_feats.shape
    assert (H, B) == (g.H, g.B), "prepared params do not match hidden / img_feats shapes"
    assert N == n_time * B, "hidden rows must equal n_time * batch"
    assert bool(use_hidden) == g.use_hidden, "prepared params built for a different use_hidden"
    assert w_gate.shape == (g.V, F)

    V, V_pad, H_pad, tn, n_vt = g.V, g.V_pad, g.H_pad, g.tn, g.n_vt
    bpe = jnp.dtype(cd).itemsize
    n_w = 2 if use_hidden else 1

    cap = _vmem_capacity_bytes()
    budget = max(int(0.85 * cap), 32 << 20)

    # ---- row tiling: biggest balanced row tile whose working set fits the VMEM budget ------
    row_target = max(16, g.row_tile)
    while True:
        n_rt = _cdiv(N, row_target)
        tm = _round_up(_cdiv(N, n_rt), 16)
        N_pad = n_rt * tm
        est1 = (2 * (tm * H_pad * bpe            # hidden rows
                     + tm * B * bpe              # one-hot rows
                     + n_w * H_pad * tn * bpe    # streamed weight tile(s)
                     + tn * 4                    # b_lin row
                     + B * tn * bpe              # pre_sigmoid / gate rows
                     + tm * tn * bpe             # z tile (bf16 out)
                     + tm * 4)                   # lse tile (out)
                + 2 * N_pad * 128 * 4)           # running max / sum-exp scratch (lane-padded)
        if est1 <= budget or row_target <= 16:
            break
        row_target = max(16, row_target // 2)
    vmem1 = int(min(max(est1 + (12 << 20), 32 << 20), budget))

    # ---- per-call small tensors ------------------------------------------------------------
    onehot = jax.nn.one_hot(jnp.arange(N) % B, B, dtype=cd)                    # [N, B]
    onehot = jnp.pad(onehot, ((0, N_pad - N), (0, 0)))
    lhs = jnp.pad(hidden.astype(cd), ((0, N_pad - N), (0, H_pad - H)))         # [N_pad, H_pad]

    # [B, V] image-gate projection computed ONCE per call (not n_time times).
    pre_sig = img_feats.astype(f32) @ w_gate.T + b_gate[None, :]
    if use_hidden:
        # padded vocab columns get +30 -> sigmoid = 1 -> z_pad = -1e30 (excluded from softmax)
        gate_rows = jnp.pad(pre_sig, ((0, 0), (0, V_pad - V)),
                            constant_values=30.0).astype(cd)
    else:
        gb = (jax.nn.sigmoid(pre_sig) + add) * (1.0 / (1.0 + add))
        gate_rows = jnp.pad(gb, ((0, 0), (0, V_pad - V)),
                            constant_values=1.0).astype(cd)

    in_specs = [pl.BlockSpec((tm, H_pad), lambda j, i: (i, 0)),     # hidden rows
                pl.BlockSpec((tm, B), lambda j, i: (i, 0)),         # one-hot rows (K=B matmul)
                pl.BlockSpec((H_pad, tn), lambda j, i: (0, j))]     # W_lin^T tile (once per j)
    args = [lhs, onehot, wproj_aug]
    if use_hidden:
        in_specs.append(pl.BlockSpec((H_pad, tn), lambda j, i: (0, j)))  # W_h2g^T tile
        args.append(wh2g_aug)
    in_specs += [pl.BlockSpec((1, tn), lambda j, i: (0, j)),        # b_lin row (f32)
                 pl.BlockSpec((B, tn), lambda j, i: (0, j))]        # pre_sigmoid / gate rows
    args += [b_row, gate_rows]

    kernel1 = functools.partial(_pass1_kernel, use_hidden=bool(use_hidden),
                                add=float(add), inv_scale=float(1.0 / (1.0 + add)))

    z, lse = pl.pallas_call(
        kernel1,
        out_shape=(jax.ShapeDtypeStruct((N_pad, V_pad), cd),       # z = proj * gate (bf16)
                   jax.ShapeDtypeStruct((N_pad, 1), f32)),          # per-row log-sum-exp
        grid_spec=pltpu.PrefetchScalarGridSpec(
            num_scalar_prefetch=0,
            grid=(n_vt, n_rt),                                      # vocab OUTER, rows INNER
            in_specs=in_specs,
            out_specs=[pl.BlockSpec((tm, tn), lambda j, i: (i, j)),
                       pl.BlockSpec((tm, 1), lambda j, i: (i, 0))],
            scratch_shapes=[pltpu.VMEM((N_pad, 1), f32),            # running max
                            pltpu.VMEM((N_pad, 1), f32)]),          # running sum-exp
        compiler_params=pltpu.CompilerParams(
            dimension_semantics=("arbitrary", "arbitrary"),
            vmem_limit_bytes=vmem1),
    )(*args)

    # ---- pass 2: lane-dense normalize out = z - lse -----------------------------------------
    obytes = jnp.dtype(out_dtype).itemsize
    tn2 = _enlarge_tile(tn, n_vt, 4096)
    per_row = 2 * tn2 * (bpe + obytes) + 16
    tm2 = _enlarge_tile(tm, n_rt, max(tm, min(1024, budget // per_row)))
    est2 = 2 * (tm2 * tn2 * (bpe + obytes) + tm2 * 8)
    vmem2 = int(min(max(est2 + (8 << 20), 32 << 20), budget))
    alias = {0: 0} if jnp.dtype(out_dtype) == jnp.dtype(cd) else {}

    out = pl.pallas_call(
        _pass2_kernel,
        out_shape=jax.ShapeDtypeStruct((N_pad, V_pad), out_dtype),
        grid_spec=pltpu.PrefetchScalarGridSpec(
            num_scalar_prefetch=0,
            grid=(N_pad // tm2, V_pad // tn2),
            in_specs=[pl.BlockSpec((tm2, tn2), lambda i, j: (i, j)),
                      pl.BlockSpec((tm2, 1), lambda i, j: (i, 0))],
            out_specs=pl.BlockSpec((tm2, tn2), lambda i, j: (i, j))),
        compiler_params=pltpu.CompilerParams(
            dimension_semantics=("parallel", "parallel"),
            vmem_limit_bytes=vmem2),
        input_output_aliases=alias,
    )(z, lse)

    if (N_pad, V_pad) != (N, V):
        out = out[:N, :V]      # drop padded rows / -1e30 padded vocab columns
    return out


# --------------------------------------------------------------------------------------
# References
# --------------------------------------------------------------------------------------
def _reference_f32(hidden, img_feats, n_time, params, add, use_hidden):
    """Exact f32 transcription of the PyTorch module."""
    w_lin, b_lin, w_gate, b_gate, w_h2g = params
    proj = hidden @ w_lin.T + b_lin
    pre_sig = img_feats @ w_gate.T + b_gate
    if use_hidden:
        pre_sig = jnp.tile(pre_sig, (n_time, 1))
        gate = jax.nn.sigmoid(pre_sig + hidden @ w_h2g.T) + add
    else:
        gate = jax.nn.sigmoid(pre_sig) + add
        gate = jnp.tile(gate, (n_time, 1))
    gate = gate / (1.0 + add)
    return jax.nn.log_softmax(proj * gate, axis=-1)


def _reference_mixed(hidden, img_feats, n_time, params, add, use_hidden,
                     compute_dtype=jnp.bfloat16):
    """Same math with the kernel's dtype policy (bf16 MXU operands, bf16 z, f32 accumulation)."""
    w_lin, b_lin, w_gate, b_gate, w_h2g = params
    f32, cd = jnp.float32, compute_dtype
    h = hidden.astype(cd).astype(f32)
    proj = h @ w_lin.astype(cd).astype(f32).T + b_lin.astype(f32)
    pre = img_feats.astype(f32) @ w_gate.astype(f32).T + b_gate.astype(f32)
    if use_hidden:
        psig = jnp.tile(pre.astype(cd).astype(f32), (n_time, 1))
        gate = jax.nn.sigmoid(psig + h @ w_h2g.astype(cd).astype(f32).T)
        if add != 0.0:
            gate = (gate + add) * (1.0 / (1.0 + add))
    else:
        gb = (jax.nn.sigmoid(pre) + add) * (1.0 / (1.0 + add))
        gate = jnp.tile(gb.astype(cd).astype(f32), (n_time, 1))
    z = proj * gate
    m = jnp.max(z, axis=-1, keepdims=True)
    lse = m + jnp.log(jnp.sum(jnp.exp(z - m), axis=-1, keepdims=True))
    return z.astype(cd).astype(f32) - lse          # mirrors the bf16 z round trip


# --------------------------------------------------------------------------------------
# Demo / self-test
# --------------------------------------------------------------------------------------
if __name__ == "__main__":
    n_time, batch = 8, 4
    hidden_size, img_feat_size, vocab_size = 40, 16, 200      # deliberately unaligned sizes
    N = n_time * batch

    key = jax.random.PRNGKey(0)
    k1, k2, k3, k4, k5, k6 = jax.random.split(key, 6)

    hidden = jax.random.normal(k1, (N, hidden_size), dtype=jnp.float32)
    img_feats = jax.random.normal(k2, (batch, img_feat_size), dtype=jnp.float32)

    # Parameter shapes from __init__: linear(H->V, bias), gate(F->V, bias=1.0), h2g(H->V, no bias)
    w_lin = 0.05 * jax.random.normal(k3, (vocab_size, hidden_size), dtype=jnp.float32)
    b_lin = 0.01 * jax.random.normal(k4, (vocab_size,), dtype=jnp.float32)
    w_gate = 0.05 * jax.random.normal(k5, (vocab_size, img_feat_size), dtype=jnp.float32)
    b_gate = jnp.ones((vocab_size,), dtype=jnp.float32)       # nn.init.constant(gate.bias, 1.0)
    w_h2g = 0.05 * jax.random.normal(k6, (vocab_size, hidden_size), dtype=jnp.float32)
    params = (w_lin, b_lin, w_gate, b_gate, w_h2g)

    fwd = jax.jit(multimodal_generator,
                  static_argnames=("geom", "n_time", "add", "use_hidden", "out_dtype"))

    for use_hidden, add in ((True, 0.0), (False, 0.5)):
        # Tiny tiles so the grid has several vocab and row tiles: exercises the swapped
        # (vocab-outer / rows-inner) loop order, the persistent (N,1) running-LSE scratch,
        # and the -1e30 padded-vocab-column handling.
        weights, geom = prepare_params(params, batch, use_hidden=use_hidden,
                                       row_tile=16, vocab_tile=128)
        out = fwd(hidden, img_feats, weights, geom=geom,
                  n_time=n_time, add=add, use_hidden=use_hidden)
        out = jax.block_until_ready(out)

        ref_mixed = _reference_mixed(hidden, img_feats, n_time, params, add, use_hidden)
        ref_f32 = _reference_f32(hidden, img_feats, n_time, params, add, use_hidden)
        np.testing.assert_allclose(np.asarray(out), np.asarray(ref_mixed),
                                   rtol=2e-3, atol=2e-3)
        np.testing.assert_allclose(np.asarray(out), np.asarray(ref_f32),
                                   rtol=5e-2, atol=5e-2)

    print("KERNEL_OK")
</pallas_src>

<mosaic_0001>
module attributes {stable_mosaic.version = 11 : i64} {
  func.func @_pass2_kernel(%arg0: i32, %arg1: i32, %arg2: memref<32x256xbf16, #tpu.memory_space<vmem>>, %arg3: memref<32x1xf32, #tpu.memory_space<vmem>>, %arg4: memref<32x256xf32, #tpu.memory_space<vmem>>) attributes {dimension_semantics = [#tpu.dimension_semantics<parallel>, #tpu.dimension_semantics<parallel>], iteration_bounds = array<i64: 1, 1>, scalar_prefetch = 0 : i64, scratch_operands = 0 : i64, tpu.core_type = #tpu.core_type<tc>, window_params = [{transform_indices = @transform_0, window_bounds = array<i64: 32, 256>}, {transform_indices = @transform_1, window_bounds = array<i64: 32, 1>}, {transform_indices = @transform_2, window_bounds = array<i64: 32, 256>}]} {
    %c0 = arith.constant 0 : index
    %c0_0 = arith.constant 0 : index
    %0 = vector.load %arg2[%c0, %c0_0] : memref<32x256xbf16, #tpu.memory_space<vmem>>, vector<32x256xbf16>
    %1 = arith.extf %0 : vector<32x256xbf16> to vector<32x256xf32>
    %c0_1 = arith.constant 0 : index
    %c0_2 = arith.constant 0 : index
    %2 = vector.load %arg3[%c0_1, %c0_2] : memref<32x1xf32, #tpu.memory_space<vmem>>, vector<32x1xf32>
    %3 = vector.broadcast %2 : vector<32x1xf32> to vector<32x256xf32>
    %4 = arith.subf %1, %3 : vector<32x256xf32>
    %c0_3 = arith.constant 0 : index
    %c0_4 = arith.constant 0 : index
    %5 = vector.load %arg4[%c0_3, %c0_4] : memref<32x256xf32, #tpu.memory_space<vmem>>, vector<32x256xf32>
    tpu.vector_store %arg4[%c0_3, %c0_4], %4 {strides = array<i32>} : memref<32x256xf32, #tpu.memory_space<vmem>>, vector<32x256xf32>,
    return
  }
  func.func @transform_0(%arg0: i32, %arg1: i32) -> (i32, i32) {
    %c0_i32 = arith.constant 0 : i32
    return %arg0, %arg1 : i32, i32
  }
  func.func @transform_1(%arg0: i32, %arg1: i32) -> (i32, i32) {
    %c0_i32 = arith.constant 0 : i32
    %c0_i32_0 = arith.constant 0 : i32
    return %arg0, %c0_i32 : i32, i32
  }
  func.func @transform_2(%arg0: i32, %arg1: i32) -> (i32, i32) {
    %c0_i32 = arith.constant 0 : i32
    return %arg0, %arg1 : i32, i32
  }
}

module attributes {stable_mosaic.version = 11 : i64} {
  func.func @_pass1_kernel(%arg0: i32, %arg1: i32, %arg2: memref<16x128xbf16, #tpu.memory_space<vmem>>, %arg3: memref<16x4xbf16, #tpu.memory_space<vmem>>, %arg4: memref<128x128xbf16, #tpu.memory_space<vmem>>, %arg5: memref<128x128xbf16, #tpu.memory_space<vmem>>, %arg6: memref<1x128xf32, #tpu.memory_space<vmem>>, %arg7: memref<4x128xbf16, #tpu.memory_space<vmem>>, %arg8: memref<16x128xbf16, #tpu.memory_space<vmem>>, %arg9: memref<16x1xf32, #tpu.memory_space<vmem>>, %arg10: memref<32x1xf32, #tpu.memory_space<vmem>>, %arg11: memref<32x1xf32, #tpu.memory_space<vmem>>) attributes {dimension_semantics = [#tpu.dimension_semantics<arbitrary>, #tpu.dimension_semantics<arbitrary>], iteration_bounds = array<i64: 2, 2>, scalar_prefetch = 0 : i64, scratch_operands = 2 : i64, tpu.core_type = #tpu.core_type<tc>, window_params = [{transform_indices = @transform_0, window_bounds = array<i64: 16, 128>}, {transform_indices = @transform_1, window_bounds = array<i64: 16, 4>}, {transform_indices = @transform_2, window_bounds = array<i64: 128, 128>}, {transform_indices = @transform_3, window_bounds = array<i64: 128, 128>}, {transform_indices = @transform_4, window_bounds = array<i64: 1, 128>}, {transform_indices = @transform_5, window_bounds = array<i64: 4, 128>}, {transform_indices = @transform_6, window_bounds = array<i64: 16, 128>}, {transform_indices = @transform_7, window_bounds = array<i64: 16, 1>}]} {
    %c0 = arith.constant 0 : index
    %c0_0 = arith.constant 0 : index
    %0 = vector.load %arg2[%c0, %c0_0] : memref<16x128xbf16, #tpu.memory_space<vmem>>, vector<16x128xbf16>
    %c0_1 = arith.constant 0 : index
    %c0_2 = arith.constant 0 : index
    %1 = vector.load %arg4[%c0_1, %c0_2] : memref<128x128xbf16, #tpu.memory_space<vmem>>, vector<128x128xbf16>
    %cst = arith.constant dense<0.000000e+00> : vector<16x128xf32>
    %2 = tpu.matmul %0, %1, %cst {dimension_numbers = #tpu.dot_dimension_numbers<[1], [0], [0], [1], [0, 0, 1, 1], [], []>} : vector<16x128xbf16>, vector<128x128xbf16>, vector<16x128xf32> -> vector<16x128xf32>
    %c0_3 = arith.constant 0 : index
    %c0_4 = arith.constant 0 : index
    %3 = vector.load %arg6[%c0_3, %c0_4] : memref<1x128xf32, #tpu.memory_space<vmem>>, vector<1x128xf32>
    %4 = vector.broadcast %3 : vector<1x128xf32> to vector<16x128xf32>
    %5 = arith.addf %2, %4 : vector<16x128xf32>
    %c0_5 = arith.constant 0 : index
    %c0_6 = arith.constant 0 : index
    %6 = vector.load %arg3[%c0_5, %c0_6] : memref<16x4xbf16, #tpu.memory_space<vmem>>, vector<16x4xbf16>
    %c0_7 = arith.constant 0 : index
    %c0_8 = arith.constant 0 : index
    %7 = vector.load %arg7[%c0_7, %c0_8] : memref<4x128xbf16, #tpu.memory_space<vmem>>, vector<4x128xbf16>
    %cst_9 = arith.constant dense<0.000000e+00> : vector<16x128xf32>
    %8 = tpu.matmul %6, %7, %cst_9 {dimension_numbers = #tpu.dot_dimension_numbers<[1], [0], [0], [1], [0, 0, 1, 1], [], []>} : vector<16x4xbf16>, vector<4x128xbf16>, vector<16x128xf32> -> vector<16x128xf32>
    %c0_10 = arith.constant 0 : index
    %c0_11 = arith.constant 0 : index
    %9 = vector.load %arg5[%c0_10, %c0_11] : memref<128x128xbf16, #tpu.memory_space<vmem>>, vector<128x128xbf16>
    %cst_12 = arith.constant dense<0.000000e+00> : vector<16x128xf32>
    %10 = tpu.matmul %0, %9, %cst_12 {dimension_numbers = #tpu.dot_dimension_numbers<[1], [0], [0], [1], [0, 0, 1, 1], [], []>} : vector<16x128xbf16>, vector<128x128xbf16>, vector<16x128xf32> -> vector<16x128xf32>
    %11 = arith.addf %8, %10 : vector<16x128xf32>
    %12 = arith.negf %11 : vector<16x128xf32>
    %13 = math.exp %12 : vector<16x128xf32>
    %cst_13 = arith.constant 1.000000e+00 : f32
    %14 = vector.broadcast %cst_13 : f32 to vector<16x128xf32>
    %15 = arith.addf %14, %13 : vector<16x128xf32>
    %16 = arith.divf %14, %15 : vector<16x128xf32>
    %17 = arith.mulf %5, %16 : vector<16x128xf32>
    %c16_i32 = arith.constant 16 : i32
    %18 = arith.muli %arg1, %c16_i32 : i32
    %19 = tpu.assume_multiple %18, 8 : i32
    %c0_i32 = arith.constant 0 : i32
    %20 = arith.cmpi eq, %arg0, %c0_i32 : i32
    %21 = arith.extui %20 : i1 to i32
    %c0_i32_14 = arith.constant 0 : i32
    %22 = arith.cmpi ne, %21, %c0_i32_14 : i32
    scf.if %22 {
      %cst_24 = arith.constant 0xFF800000 : f32
      %48 = vector.broadcast %cst_24 : f32 to vector<16x1xf32>
      %49 = arith.index_cast %19 : i32 to index
      %c0_25 = arith.constant 0 : index
      %50 = vector.load %arg10[%49, %c0_25] : memref<32x1xf32, #tpu.memory_space<vmem>>, vector<16x1xf32>
      tpu.vector_store %arg10[%49, %c0_25], %48 {strides = array<i32>} : memref<32x1xf32, #tpu.memory_space<vmem>>, vector<16x1xf32>,
      %cst_26 = arith.constant 0.000000e+00 : f32
      %51 = vector.broadcast %cst_26 : f32 to vector<16x1xf32>
      %52 = arith.index_cast %19 : i32 to index
      %c0_27 = arith.constant 0 : index
      %53 = vector.load %arg11[%52, %c0_27] : memref<32x1xf32, #tpu.memory_space<vmem>>, vector<16x1xf32>
      tpu.vector_store %arg11[%52, %c0_27], %51 {strides = array<i32>} : memref<32x1xf32, #tpu.memory_space<vmem>>, vector<16x1xf32>,
    } else {
    }
    %23 = arith.index_cast %19 : i32 to index
    %c0_15 = arith.constant 0 : index
    %24 = vector.load %arg10[%23, %c0_15] : memref<32x1xf32, #tpu.memory_space<vmem>>, vector<16x1xf32>
    %cst_16 = arith.constant dense<0xFF800000> : vector<16xf32>
    %25 = vector.multi_reduction <maximumf>, %17, %cst_16 [1] : vector<16x128xf32> to vector<16xf32>
    %26 = vector.shape_cast %25 : vector<16xf32> to vector<16x1xf32>
    %27 = arith.maximumf %24, %26 : vector<16x1xf32>
    %28 = arith.index_cast %19 : i32 to index
    %c0_17 = arith.constant 0 : index
    %29 = vector.load %arg11[%28, %c0_17] : memref<32x1xf32, #tpu.memory_space<vmem>>, vector<16x1xf32>
    %30 = arith.subf %24, %27 : vector<16x1xf32>
    %31 = math.exp %30 : vector<16x1xf32>
    %32 = arith.mulf %29, %31 : vector<16x1xf32>
    %33 = vector.broadcast %27 : vector<16x1xf32> to vector<16x128xf32>
    %34 = arith.subf %17, %33 : vector<16x128xf32>
    %35 = math.exp %34 : vector<16x128xf32>
    %cst_18 = arith.constant dense<0.000000e+00> : vector<16xf32>
    %36 = vector.multi_reduction <add>, %35, %cst_18 [1] : vector<16x128xf32> to vector<16xf32>
    %37 = vector.shape_cast %36 : vector<16xf32> to vector<16x1xf32>
    %38 = arith.addf %32, %37 : vector<16x1xf32>
    %39 = arith.index_cast %19 : i32 to index
    %c0_19 = arith.constant 0 : index
    %40 = vector.load %arg10[%39, %c0_19] : memref<32x1xf32, #tpu.memory_space<vmem>>, vector<16x1xf32>
    tpu.vector_store %arg10[%39, %c0_19], %27 {strides = array<i32>} : memref<32x1xf32, #tpu.memory_space<vmem>>, vector<16x1xf32>,
    %41 = arith.index_cast %19 : i32 to index
    %c0_20 = arith.constant 0 : index
    %42 = vector.load %arg11[%41, %c0_20] : memref<32x1xf32, #tpu.memory_space<vmem>>, vector<16x1xf32>
    tpu.vector_store %arg11[%41, %c0_20], %38 {strides = array<i32>} : memref<32x1xf32, #tpu.memory_space<vmem>>, vector<16x1xf32>,
    %43 = arith.truncf %17 : vector<16x128xf32> to vector<16x128xbf16>
    %c0_21 = arith.constant 0 : index
    %c0_22 = arith.constant 0 : index
    %44 = vector.load %arg8[%c0_21, %c0_22] : memref<16x128xbf16, #tpu.memory_space<vmem>>, vector<16x128xbf16>
    tpu.vector_store %arg8[%c0_21, %c0_22], %43 {strides = array<i32>} : memref<16x128xbf16, #tpu.memory_space<vmem>>, vector<16x128xbf16>,
    %c1_i32 = arith.constant 1 : i32
    %45 = arith.cmpi eq, %arg0, %c1_i32 : i32
    %46 = arith.extui %45 : i1 to i32
    %c0_i32_23 = arith.constant 0 : i32
    %47 = arith.cmpi ne, %46, %c0_i32_23 : i32
    scf.if %47 {
      %48 = math.log %38 : vector<16x1xf32>
      %49 = arith.addf %27, %48 : vector<16x1xf32>
      %c0_24 = arith.constant 0 : index
      %c0_25 = arith.constant 0 : index
      %50 = vector.load %arg9[%c0_24, %c0_25] : memref<16x1xf32, #tpu.memory_space<vmem>>, vector<16x1xf32>
      tpu.vector_store %arg9[%c0_24, %c0_25], %49 {strides = array<i32>} : memref<16x1xf32, #tpu.memory_space<vmem>>, vector<16x1xf32>,
    } else {
    }
    return
  }
  func.func @transform_0(%arg0: i32, %arg1: i32) -> (i32, i32) {
    %c0_i32 = arith.constant 0 : i32
    %c0_i32_0 = arith.constant 0 : i32
    return %arg1, %c0_i32 : i32, i32
  }
  func.func @transform_1(%arg0: i32, %arg1: i32) -> (i32, i32) {
    %c0_i32 = arith.constant 0 : i32
    %c0_i32_0 = arith.constant 0 : i32
    return %arg1, %c0_i32 : i32, i32
  }
  func.func @transform_2(%arg0: i32, %arg1: i32) -> (i32, i32) {
    %c0_i32 = arith.constant 0 : i32
    %c0_i32_0 = arith.constant 0 : i32
    return %c0_i32, %arg0 : i32, i32
  }
  func.func @transform_3(%arg0: i32, %arg1: i32) -> (i32, i32) {
    %c0_i32 = arith.constant 0 : i32
    %c0_i32_0 = arith.constant 0 : i32
    return %c0_i32, %arg0 : i32, i32
  }
  func.func @transform_4(%arg0: i32, %arg1: i32) -> (i32, i32) {
    %c0_i32 = arith.constant 0 : i32
    %c0_i32_0 = arith.constant 0 : i32
    return %c0_i32, %arg0 : i32, i32
  }
  func.func @transform_5(%arg0: i32, %arg1: i32) -> (i32, i32) {
    %c0_i32 = arith.constant 0 : i32
    %c0_i32_0 = arith.constant 0 : i32
    return %c0_i32, %arg0 : i32, i32
  }
  func.func @transform_6(%arg0: i32, %arg1: i32) -> (i32, i32) {
    %c0_i32 = arith.constant 0 : i32
    return %arg1, %arg0 : i32, i32
  }
  func.func @transform_7(%arg0: i32, %arg1: i32) -> (i32, i32) {
    %c0_i32 = arith.constant 0 : i32
    %c0_i32_0 = arith.constant 0 : i32
    return %arg1, %c0_i32 : i32, i32
  }
}

</mosaic_0001>

<llo_original>
// kernel: multimodal_generator.3
$region0: #{multimodal_generator.3}
  #allocation0 [shape = 'u32[]', space=smem, size = 0x4, offset = 0x4, fixed_abs, tag = 'smem constant byte address 0x4 - core index']
  #allocation1 [shape = 'u32[144,128]{1,0:T(1,128)}', space=vmem, size = 0x12000, scoped, tag = 'internal scratch']
  %s0 = inlined_call_operand.vmem [shape: bf16[32,256], index: 0, kind: input, shape index: {}]
  %s1 = inlined_call_operand.vmem [shape: f32[32,1], index: 1, kind: input, shape index: {}]
  %s2 = inlined_call_operand.hbm [shape: f32[32,256], index: 2, kind: output, shape index: {}]
  %s3 = sld [smem:[#allocation0]]
  $region18: #{multimodal_generator.3} parent=0
    _
  %s5 = ssub.s32 1, %s3
  %s6 = scalar_select 0, %s5, %s3
  $region1: #{multimodal_generator.3} parent=0
    #allocation2 [shape = 'u8[32768]{0}', space=vmem, size = 0x8000, scoped, tag = 'output window, operand 0, single buffered']
    #allocation3 [shape = 's32[1]{0}', space=sflag, size = 0x4, scoped, tag = 'scoped memory for multimodal_generator.3']
    %7 = vsyncpa [#allocation3], 0
    // Predicated region
    $region2: #{multimodal_generator.3} parent=1 // pred_check
      _
    $region3: #{multimodal_generator.3} parent=1 // pred_check_branch
      %9 = sbr.rel (0) target = $region5
    $region4: #{multimodal_generator.3} parent=1 // pred_region
      _
    $region5: #{multimodal_generator.3} parent=1 // pred_fallthru
      _
    // Predicated region
    $region6: #{multimodal_generator.3} parent=1 // pred_check
      _
    $region7: #{multimodal_generator.3} parent=1 // pred_check_branch
      %11 = sbr.rel (0) target = $region9
    $region8: #{multimodal_generator.3} parent=1 // pred_region
      _
    $region9: #{multimodal_generator.3} parent=1 // pred_fallthru
      _
    %v12 = vld [vmem:[%s0] sm:$0xff]
    %v13 = vld [vmem:[%s0 + $0x8] sm:$0xff]
    %v14 = vld [vmem:[%s0 + $0x10] sm:$0xff]
    %v15 = vld [vmem:[%s0 + $0x18] sm:$0xff]
    %v16 = vunpack.c.l.bf16 %v12
    %v17 = vunpack.c.h.bf16 %v12
    %v18 = vunpack.c.l.bf16 %v13
    %v19 = vunpack.c.h.bf16 %v13
    %v20 = vunpack.c.l.bf16 %v14
    %v21 = vunpack.c.h.bf16 %v14
    %v22 = vunpack.c.l.bf16 %v15
    %v23 = vunpack.c.h.bf16 %v15
    %v24 = vld [vmem:[%s1] sm:$0xff]
    %v25 = vld [vmem:[%s1 + $0x8] sm:$0xff]
    %v26 = vld [vmem:[%s1 + $0x10] sm:$0xff]
    %v27 = vld [vmem:[%s1 + $0x18] sm:$0xff]
    %29 = vset.pattern.permute.xlu0 0
    %30 = vperm.xlu0 %29, %v24
    %v31 = vpop.permute.xlu0 %30
    %34 = vset.pattern.permute.xlu0 0
    %35 = vperm.xlu0 %34, %v25
    %v36 = vpop.permute.xlu0 %35
    %39 = vset.pattern.permute.xlu0 0
    %40 = vperm.xlu0 %39, %v26
    %v41 = vpop.permute.xlu0 %40
    %44 = vset.pattern.permute.xlu0 0
    %45 = vperm.xlu0 %44, %v27
    %v46 = vpop.permute.xlu0 %45
    %v48 = vsub.f32 %v16, %v31
    %v49 = vsub.f32 %v17, %v31
    %v50 = vsub.f32 %v18, %v36
    %v51 = vsub.f32 %v19, %v36
    %v52 = vsub.f32 %v20, %v41
    %v53 = vsub.f32 %v21, %v41
    %v54 = vsub.f32 %v22, %v46
    %v55 = vsub.f32 %v23, %v46
    %56 = vst [vmem:[#allocation2] sm:$0xff] %v48
    %57 = vst [vmem:[#allocation2 + $0x8] sm:$0xff] %v49
    %58 = vst [vmem:[#allocation2 + $0x10] sm:$0xff] %v50
    %59 = vst [vmem:[#allocation2 + $0x18] sm:$0xff] %v51
    %60 = vst [vmem:[#allocation2 + $0x20] sm:$0xff] %v52
    %61 = vst [vmem:[#allocation2 + $0x28] sm:$0xff] %v53
    %62 = vst [vmem:[#allocation2 + $0x30] sm:$0xff] %v54
    %63 = vst [vmem:[#allocation2 + $0x38] sm:$0xff] %v55
    // Predicated region
    $region10: #{multimodal_generator.3} parent=1 // pred_check
      _
    $region11: #{multimodal_generator.3} parent=1 // pred_check_branch
      %65 = sbr.rel (0) target = $region13
    $region12: #{multimodal_generator.3} parent=1 // pred_region
      %s67 = ssub.s32 1024, 1024
      %68 = vsyncadd [#allocation3], %s67
      %s69 = sshll.u32 [#allocation2], 4
      %s70 = int_to_ptr.vmem [resolvable:$true] %s69
      %75 = dma.vmem_to_hbm [thread:$0]  %s70, 1024, %s2, [#allocation3], 256, 256, 16
    $region13: #{multimodal_generator.3} parent=1 // pred_fallthru
      _
    // Predicated region
    $region14: #{multimodal_generator.3} parent=1 // pred_check
      _
    $region15: #{multimodal_generator.3} parent=1 // pred_check_branch
      %77 = sbr.rel (0) target = $region17
    $region16: #{multimodal_generator.3} parent=1 // pred_region
      %78 = dma.done [#allocation3], 1024
    $region17: #{multimodal_generator.3} parent=1 // pred_fallthru
      _
    %79 = vsyncpa [#allocation3], 1

// kernel: multimodal_generator.2
$region0: #{multimodal_generator.2}
  #allocation0 [shape = 'u32[]', space=smem, size = 0x4, offset = 0x4, fixed_abs, tag = 'smem constant byte address 0x4 - core index']
  #allocation1 [shape = 'u32[144,128]{1,0:T(1,128)}', space=vmem, size = 0x12000, scoped, tag = 'internal scratch']
  #allocation2 [shape = 'f32[32,1]{1,0:T(8,128)}', space=vmem, size = 0x4000, scoped, tag = 'scratch operand']
  #allocation3 [shape = 'f32[32,1]{1,0:T(8,128)}', space=vmem, size = 0x4000, scoped, tag = 'scratch operand']
  %s0 = inlined_call_operand.vmem [shape: bf16[32,128], index: 0, kind: input, shape index: {}]
  %s1 = inlined_call_operand.vmem [shape: bf16[32,4], index: 1, kind: input, shape index: {}]
  %s2 = inlined_call_operand.vmem [shape: bf16[128,256], index: 2, kind: input, shape index: {}]
  %s3 = inlined_call_operand.hbm [shape: bf16[128,256], index: 3, kind: input, shape index: {}]
  %s4 = inlined_call_operand.vmem [shape: f32[1,256], index: 4, kind: input, shape index: {}]
  %s5 = inlined_call_operand.vmem [shape: bf16[4,256], index: 5, kind: input, shape index: {}]
  %s6 = inlined_call_operand.vmem [shape: bf16[32,256], index: 6, kind: output, shape index: {0}]
  %s7 = inlined_call_operand.vmem [shape: f32[32,1], index: 7, kind: output, shape index: {1}]
  %8 = xla_tuple %s6, %s7
  %s9 = sld [smem:[#allocation0]]
  $region155: #{multimodal_generator.2} parent=0
    _
  %s11 = ssub.s32 1, %s9
  %s12 = scalar_select 0, %s11, %s9
  $region1: #{multimodal_generator.2} parent=0
    #allocation4 [shape = 'u8[65536]{0}', space=vmem, size = 0x10000, scoped, tag = 'input window, operand 2']
    #allocation5 [shape = 'u8[65536]{0}', space=vmem, size = 0x10000, scoped, tag = 'input window, operand 3']
    #allocation6 [shape = 's32[2]{0}', space=sflag, size = 0x8, scoped, tag = 'scoped memory for multimodal_generator.2']
    #allocation7 [shape = 'u8[8192]{0}', space=vmem, size = 0x2000, scoped, tag = 'output window, operand 0']
    %13 = vsyncpa [#allocation6], 0
    %s14 = scalar_lea.sflag [#allocation6], 1
    %15 = vsyncpa %s14, 0
    loop: start=0, step=1, limit=6
    $region2: #{multimodal_generator.2} parent=1 // loop_pre_header
      _
    $region3: #{multimodal_generator.2} parent=1 // loop_header
      %s17 = sphi 0, %s21
      %p18 = scmp.ge.s32.totalorder %s17, 6
      %s24 = sphi 0, %s36
      %s25 = sphi 0, %s32
      %s26 = sphi 0, %s24
      %s27 = sphi 0, %s25
      %s28 = sphi 0, %s26
      %s29 = sphi 0, %s27
      %s39 = sphi 0, %s41
      %s42 = sphi 0, %s39
      %s43 = sphi 0, %s42
      %s59 = sphi 0, %s43
      %s65 = sphi 0, %s67
      %s68 = sphi 0, %s65
      %s69 = sphi 0, %s68
      %s85 = sphi 0, %s69
      %s91 = sphi 0, %s93
      %s94 = sphi 0, %s91
      %s95 = sphi 0, %s94
      %s111 = sphi 0, %s95
      %s117 = sphi 0, %s119
      %s120 = sphi 0, %s117
      %s121 = sphi 0, %s120
      %s137 = sphi 0, %s121
      %s143 = sphi 0, %s145
      %s146 = sphi 0, %s143
      %s147 = sphi 0, %s146
      %s163 = sphi 0, %s147
      %s169 = sphi 0, %s171
      %s172 = sphi 0, %s169
      %s173 = sphi 0, %s172
      %s189 = sphi 0, %s173
      %s197 = sphi 0, %s199
      %s200 = sphi 0, %s197
      %s201 = sphi 0, %s200
      %s217 = sphi 0, %s201
      %s223 = sphi 0, %s225
      %s226 = sphi 0, %s223
      %s227 = sphi 0, %s226
      %s243 = sphi 0, %s227
    $region4: #{multimodal_generator.2} parent=1 // loop_header_branch
      %20 = sbr.rel (%p18) target = $region8
    $region5: #{multimodal_generator.2} parent=1 // loop_body
      %s22 = ssub.s32 %s17, 1
      %s23 = ssub.s32 %s17, 2
      %s30 = sadd.s32 1, %s25
      %p31 = scmp.ge.s32.totalorder %s30, 2
      %s32 = scalar_select %p31, 0, %s30
      %s33 = sadd.s32 1, %s24
      %s34 = scalar_select %p31, %s33, %s24
      %p35 = scmp.ge.s32.totalorder %s34, 2
      %s36 = scalar_select %p35, 0, %s34
      %s37 = ssub.s32 %s25, %s32
      %p38 = scmp.eq.s32.totalorder %s37, 0
      %s40 = sadd.s32 %s39, 1
      %s41 = scalar_select %p38, %s39, %s40
      %p44 = pneg %p38
      %p45 = scmp.eq.s32.totalorder %s17, 3
      %p46 = por %p44, %p45
      %p47 = scmp.ne.s32.totalorder %s39, %s42
      %p48 = scmp.eq.s32.totalorder %s17, 0
      %p49 = por %p47, %p48
      %p50 = scmp.ne.s32.totalorder %s39, %s42
      %p51 = scmp.eq.s32.totalorder %s22, 3
      %p52 = por %p50, %p51
      %p53 = scmp.ne.s32.totalorder %s42, %s43
      %p54 = scmp.eq.s32.totalorder %s22, 0
      %p55 = por %p53, %p54
      %p56 = scmp.ne.s32.totalorder %s42, %s43
      %p57 = scmp.eq.s32.totalorder %s23, 3
      %p58 = por %p56, %p57
      %p60 = scmp.ne.s32.totalorder %s43, %s59
      %p61 = scmp.eq.s32.totalorder %s23, 0
      %p62 = por %p60, %p61
      %s63 = ssub.s32 %s25, %s32
      %p64 = scmp.eq.s32.totalorder %s63, 0
      %s66 = sadd.s32 %s65, 1
      %s67 = scalar_select %p64, %s65, %s66
      %p70 = pneg %p64
      %p71 = scmp.eq.s32.totalorder %s17, 3
      %p72 = por %p70, %p71
      %p73 = scmp.ne.s32.totalorder %s65, %s68
      %p74 = scmp.eq.s32.totalorder %s17, 0
      %p75 = por %p73, %p74
      %p76 = scmp.ne.s32.totalorder %s65, %s68
      %p77 = scmp.eq.s32.totalorder %s22, 3
      %p78 = por %p76, %p77
      %p79 = scmp.ne.s32.totalorder %s68, %s69
      %p80 = scmp.eq.s32.totalorder %s22, 0
      %p81 = por %p79, %p80
      %p82 = scmp.ne.s32.totalorder %s68, %s69
      %p83 = scmp.eq.s32.totalorder %s23, 3
      %p84 = por %p82, %p83
      %p86 = scmp.ne.s32.totalorder %s69, %s85
      %p87 = scmp.eq.s32.totalorder %s23, 0
      %p88 = por %p86, %p87
      %s89 = ssub.s32 %s24, %s36
      %p90 = scmp.eq.s32.totalorder %s89, 0
      %s92 = sadd.s32 %s91, 1
      %s93 = scalar_select %p90, %s91, %s92
      %p96 = pneg %p90
      %p97 = scmp.eq.s32.totalorder %s17, 3
      %p98 = por %p96, %p97
      %p99 = scmp.ne.s32.totalorder %s91, %s94
      %p100 = scmp.eq.s32.totalorder %s17, 0
      %p101 = por %p99, %p100
      %p102 = scmp.ne.s32.totalorder %s91, %s94
      %p103 = scmp.eq.s32.totalorder %s22, 3
      %p104 = por %p102, %p103
      %p105 = scmp.ne.s32.totalorder %s94, %s95
      %p106 = scmp.eq.s32.totalorder %s22, 0
      %p107 = por %p105, %p106
      %p108 = scmp.ne.s32.totalorder %s94, %s95
      %p109 = scmp.eq.s32.totalorder %s23, 3
      %p110 = por %p108, %p109
      %p112 = scmp.ne.s32.totalorder %s95, %s111
      %p113 = scmp.eq.s32.totalorder %s23, 0
      %p114 = por %p112, %p113
      %s115 = ssub.s32 %s24, %s36
      %p116 = scmp.eq.s32.totalorder %s115, 0
      %s118 = sadd.s32 %s117, 1
      %s119 = scalar_select %p116, %s117, %s118
      %p122 = pneg %p116
      %p123 = scmp.eq.s32.totalorder %s17, 3
      %p124 = por %p122, %p123
      %p125 = scmp.ne.s32.totalorder %s117, %s120
      %p126 = scmp.eq.s32.totalorder %s17, 0
      %p127 = por %p125, %p126
      %p128 = scmp.ne.s32.totalorder %s117, %s120
      %p129 = scmp.eq.s32.totalorder %s22, 3
      %p130 = por %p128, %p129
      %p131 = scmp.ne.s32.totalorder %s120, %s121
      %p132 = scmp.eq.s32.totalorder %s22, 0
      %p133 = por %p131, %p132
      %p134 = scmp.ne.s32.totalorder %s120, %s121
      %p135 = scmp.eq.s32.totalorder %s23, 3
      %p136 = por %p134, %p135
      %p138 = scmp.ne.s32.totalorder %s121, %s137
      %p139 = scmp.eq.s32.totalorder %s23, 0
      %p140 = por %p138, %p139
      %s141 = ssub.s32 %s24, %s36
      %p142 = scmp.eq.s32.totalorder %s141, 0
      %s144 = sadd.s32 %s143, 1
      %s145 = scalar_select %p142, %s143, %s144
      %p148 = pneg %p142
      %p149 = scmp.eq.s32.totalorder %s17, 3
      %p150 = por %p148, %p149
      %p151 = scmp.ne.s32.totalorder %s143, %s146
      %p152 = scmp.eq.s32.totalorder %s17, 0
      %p153 = por %p151, %p152
      %p154 = scmp.ne.s32.totalorder %s143, %s146
      %p155 = scmp.eq.s32.totalorder %s22, 3
      %p156 = por %p154, %p155
      %p157 = scmp.ne.s32.totalorder %s146, %s147
      %p158 = scmp.eq.s32.totalorder %s22, 0
      %p159 = por %p157, %p158
      %p160 = scmp.ne.s32.totalorder %s146, %s147
      %p161 = scmp.eq.s32.totalorder %s23, 3
      %p162 = por %p160, %p161
      %p164 = scmp.ne.s32.totalorder %s147, %s163
      %p165 = scmp.eq.s32.totalorder %s23, 0
      %p166 = por %p164, %p165
      %s167 = ssub.s32 %s24, %s36
      %p168 = scmp.eq.s32.totalorder %s167, 0
      %s170 = sadd.s32 %s169, 1
      %s171 = scalar_select %p168, %s169, %s170
      %p174 = pneg %p168
      %p175 = scmp.eq.s32.totalorder %s17, 3
      %p176 = por %p174, %p175
      %p177 = scmp.ne.s32.totalorder %s169, %s172
      %p178 = scmp.eq.s32.totalorder %s17, 0
      %p179 = por %p177, %p178
      %p180 = scmp.ne.s32.totalorder %s169, %s172
      %p181 = scmp.eq.s32.totalorder %s22, 3
      %p182 = por %p180, %p181
      %p183 = scmp.ne.s32.totalorder %s172, %s173
      %p184 = scmp.eq.s32.totalorder %s22, 0
      %p185 = por %p183, %p184
      %p186 = scmp.ne.s32.totalorder %s172, %s173
      %p187 = scmp.eq.s32.totalorder %s23, 3
      %p188 = por %p186, %p187
      %p190 = scmp.ne.s32.totalorder %s173, %s189
      %p191 = scmp.eq.s32.totalorder %s23, 0
      %p192 = por %p190, %p191
      %s193 = ssub.s32 %s25, %s32
      %s194 = ssub.s32 %s24, %s36
      %s195 = sor.u32 %s193, %s194
      %p196 = scmp.eq.s32.totalorder %s195, 0
      %s198 = sadd.s32 %s197, 1
      %s199 = scalar_select %p196, %s197, %s198
      %p202 = pneg %p196
      %p203 = scmp.eq.s32.totalorder %s17, 3
      %p204 = por %p202, %p203
      %p205 = scmp.ne.s32.totalorder %s197, %s200
      %p206 = scmp.eq.s32.totalorder %s17, 0
      %p207 = por %p205, %p206
      %p208 = scmp.ne.s32.totalorder %s197, %s200
      %p209 = scmp.eq.s32.totalorder %s22, 3
      %p210 = por %p208, %p209
      %p211 = scmp.ne.s32.totalorder %s200, %s201
      %p212 = scmp.eq.s32.totalorder %s22, 0
      %p213 = por %p211, %p212
      %p214 = scmp.ne.s32.totalorder %s200, %s201
      %p215 = scmp.eq.s32.totalorder %s23, 3
      %p216 = por %p214, %p215
      %p218 = scmp.ne.s32.totalorder %s201, %s217
      %p219 = scmp.eq.s32.totalorder %s23, 0
      %p220 = por %p218, %p219
      %s221 = ssub.s32 %s25, %s32
      %p222 = scmp.eq.s32.totalorder %s221, 0
      %s224 = sadd.s32 %s223, 1
      %s225 = scalar_select %p222, %s223, %s224
      %p228 = pneg %p222
      %p229 = scmp.eq.s32.totalorder %s17, 3
      %p230 = por %p228, %p229
      %p231 = scmp.ne.s32.totalorder %s223, %s226
      %p232 = scmp.eq.s32.totalorder %s17, 0
      %p233 = por %p231, %p232
      %p234 = scmp.ne.s32.totalorder %s223, %s226
      %p235 = scmp.eq.s32.totalorder %s22, 3
      %p236 = por %p234, %p235
      %p237 = scmp.ne.s32.totalorder %s226, %s227
      %p238 = scmp.eq.s32.totalorder %s22, 0
      %p239 = por %p237, %p238
      %p240 = scmp.ne.s32.totalorder %s226, %s227
      %p241 = scmp.eq.s32.totalorder %s23, 3
      %p242 = por %p240, %p241
      %p244 = scmp.ne.s32.totalorder %s227, %s243
      %p245 = scmp.eq.s32.totalorder %s23, 0
      %p246 = por %p244, %p245
      %p247 = scmp.le.s32.totalorder 1, %s17
      %p248 = scmp.lt.s32.totalorder %s17, 5
      %p249 = pnand %p247, %p248
      %p250 = pneg %p249
      // Predicated region
      $region9: #{multimodal_generator.2} parent=5 // pred_check
        _
      $region10: #{multimodal_generator.2} parent=5 // pred_check_branch
        %252 = sbr.rel (%p249) target = $region12
      $region11: #{multimodal_generator.2} parent=5 // pred_region
        %s253 = ssub.s32 %s17, 1
      $region12: #{multimodal_generator.2} parent=5 // pred_fallthru
        _
      %p254 = scmp.lt.s32.totalorder %s17, 4
      // Predicated region
      $region13: #{multimodal_generator.2} parent=5 // pred_check
        %p255 = pneg %p254
      $region14: #{multimodal_generator.2} parent=5 // pred_check_branch
        %257 = sbr.rel (%p255) target = $region16
      $region15: #{multimodal_generator.2} parent=5 // pred_region
        // Predicated region
        $region17: #{multimodal_generator.2} parent=15 // pred_check
          %p258 = pneg %p49
        $region18: #{multimodal_generator.2} parent=15 // pred_check_branch
          %260 = sbr.rel (%p258) target = $region20
        $region19: #{multimodal_generator.2} parent=15 // pred_region
          %s261 = smul.u32 2, %s25
          %p262 = scmp.lt.s32.totalorder %s261, 3
          %s263 = scalar_select %p262, %s261, 3
          %s264 = smul.addr %s263, 4
          %s265 = scalar_lea.vmem %s0, %s264
          %s266 = smul.u32 2, %s25
        $region20: #{multimodal_generator.2} parent=15 // pred_fallthru
          _
        // Predicated region
        $region21: #{multimodal_generator.2} parent=15 // pred_check
          %p267 = pneg %p75
        $region22: #{multimodal_generator.2} parent=15 // pred_check_branch
          %269 = sbr.rel (%p267) target = $region24
        $region23: #{multimodal_generator.2} parent=15 // pred_region
          %s270 = smul.u32 2, %s25
          %p271 = scmp.lt.s32.totalorder %s270, 3
          %s272 = scalar_select %p271, %s270, 3
          %s273 = smul.addr %s272, 4
          %s274 = scalar_lea.vmem %s1, %s273
          %s275 = smul.u32 2, %s25
        $region24: #{multimodal_generator.2} parent=15 // pred_fallthru
          _
        // Predicated region
        $region25: #{multimodal_generator.2} parent=15 // pred_check
          %p276 = pneg %p101
        $region26: #{multimodal_generator.2} parent=15 // pred_check_branch
          %278 = sbr.rel (%p276) target = $region28
        $region27: #{multimodal_generator.2} parent=15 // pred_region
          %s279 = sand.u32 %s91, 1
          %s280 = sand.u32 %s91, 1
          %s281 = smul.addr %s280, 64
          %s282 = scalar_lea.vmem [#allocation4], %s281
          %s283 = smul.addr %s24, 4
          %s284 = scalar_lea.vmem %s2, %s283
          // Predicated region
          $region29: #{multimodal_generator.2} parent=27 // pred_check
            _
          $region30: #{multimodal_generator.2} parent=27 // pred_check_branch
            %286 = sbr.rel (0) target = $region32
          $region31: #{multimodal_generator.2} parent=27 // pred_region
            // Predicated region
            $region33: #{multimodal_generator.2} parent=31 // pred_check
              _
            $region34: #{multimodal_generator.2} parent=31 // pred_check_branch
              %288 = sbr.rel target = $region36
            $region35: #{multimodal_generator.2} parent=31 // pred_region
              // Predicated region
              $region48: #{multimodal_generator.2} parent=35 // pred_check
                _
              $region49: #{multimodal_generator.2} parent=35 // pred_check_branch
                %333 = sbr.rel (0) target = $region51
              $region50: #{multimodal_generator.2} parent=35 // pred_region
                loop: start=0, step=1, limit=1
                $region52: #{multimodal_generator.2} parent=50 // loop_pre_header
                  _
                $region53: #{multimodal_generator.2} parent=50 // loop_header
                  %s335 = sphi 0, %s339
                  %p336 = scmp.ge.s32.totalorder %s335, 1
                  %s340 = sphi %s284, %s284
                  %s341 = sphi %s282, %s282
                $region54: #{multimodal_generator.2} parent=50 // loop_header_branch
                  %338 = sbr.rel (%p336) target = $region58
                $region55: #{multimodal_generator.2} parent=50 // loop_body
                  _
                $region56: #{multimodal_generator.2} parent=50 // loop_footer
                  %s339 = sadd.s32 1, %s335
                $region57: #{multimodal_generator.2} parent=50 // loop_footer_branch
                  %334 = sbr.rel target = $region53
                $region58: #{multimodal_generator.2} parent=50 // loop_exit
                  _
                loop: start=0, step=1, limit=1
                $region59: #{multimodal_generator.2} parent=50 // loop_pre_header
                  _
                $region60: #{multimodal_generator.2} parent=50 // loop_header
                  %s344 = sphi 0, %s348
                  %p345 = scmp.ge.s32.totalorder %s344, 1
                  %s349 = sphi %s284, %s284
                  %s350 = sphi %s282, %s282
                $region61: #{multimodal_generator.2} parent=50 // loop_header_branch
                  %347 = sbr.rel (%p345) target = $region65
                $region62: #{multimodal_generator.2} parent=50 // loop_body
                  %v351 = vld [vmem:[%s349] sm:$0xf]
                  %352 = vst [vmem:[%s350] sm:$0xf] %v351
                  %v353 = vld [vmem:[%s349 + $0x8] sm:$0xf]
                  %354 = vst [vmem:[%s350 + $0x4] sm:$0xf] %v353
                  %v355 = vld [vmem:[%s349 + $0x10] sm:$0xf]
                  %356 = vst [vmem:[%s350 + $0x8] sm:$0xf] %v355
                  %v357 = vld [vmem:[%s349 + $0x18] sm:$0xf]
                  %358 = vst [vmem:[%s350 + $0xc] sm:$0xf] %v357
                  %v359 = vld [vmem:[%s349 + $0x20] sm:$0xf]
                  %360 = vst [vmem:[%s350 + $0x10] sm:$0xf] %v359
                  %v361 = vld [vmem:[%s349 + $0x28] sm:$0xf]
                  %362 = vst [vmem:[%s350 + $0x14] sm:$0xf] %v361
                  %v363 = vld [vmem:[%s349 + $0x30] sm:$0xf]
                  %364 = vst [vmem:[%s350 + $0x18] sm:$0xf] %v363
                  %v365 = vld [vmem:[%s349 + $0x38] sm:$0xf]
                  %366 = vst [vmem:[%s350 + $0x1c] sm:$0xf] %v365
                  %v367 = vld [vmem:[%s349 + $0x40] sm:$0xf]
                  %368 = vst [vmem:[%s350 + $0x20] sm:$0xf] %v367
                  %v369 = vld [vmem:[%s349 + $0x48] sm:$0xf]
                  %370 = vst [vmem:[%s350 + $0x24] sm:$0xf] %v369
                  %v371 = vld [vmem:[%s349 + $0x50] sm:$0xf]
                  %372 = vst [vmem:[%s350 + $0x28] sm:$0xf] %v371
                  %v373 = vld [vmem:[%s349 + $0x58] sm:$0xf]
                  %374 = vst [vmem:[%s350 + $0x2c] sm:$0xf] %v373
                  %v375 = vld [vmem:[%s349 + $0x60] sm:$0xf]
                  %376 = vst [vmem:[%s350 + $0x30] sm:$0xf] %v375
                  %v377 = vld [vmem:[%s349 + $0x68] sm:$0xf]
                  %378 = vst [vmem:[%s350 + $0x34] sm:$0xf] %v377
                  %v379 = vld [vmem:[%s349 + $0x70] sm:$0xf]
                  %380 = vst [vmem:[%s350 + $0x38] sm:$0xf] %v379
                  %v381 = vld [vmem:[%s349 + $0x78] sm:$0xf]
                  %382 = vst [vmem:[%s350 + $0x3c] sm:$0xf] %v381
                $region63: #{multimodal_generator.2} parent=50 // loop_footer
                  %s348 = sadd.s32 1, %s344
                $region64: #{multimodal_generator.2} parent=50 // loop_footer_branch
                  %343 = sbr.rel target = $region60
                $region65: #{multimodal_generator.2} parent=50 // loop_exit
                  _
              $region51: #{multimodal_generator.2} parent=35 // pred_fallthru
                _
            $region36: #{multimodal_generator.2} parent=31 // pred_fallthru
              _
            // Predicated region
            $region37: #{multimodal_generator.2} parent=31 // pred_check
              _
            $region38: #{multimodal_generator.2} parent=31 // pred_check_branch
              %290 = sbr.rel (0) target = $region40
            $region39: #{multimodal_generator.2} parent=31 // pred_region
              loop: start=0, step=1, limit=1
              $region41: #{multimodal_generator.2} parent=39 // loop_pre_header
                _
              $region42: #{multimodal_generator.2} parent=39 // loop_header
                %s293 = sphi 0, %s297
                %p294 = scmp.ge.s32.totalorder %s293, 1
                %s298 = sphi %s284, %s284
                %s299 = sphi %s282, %s282
              $region43: #{multimodal_generator.2} parent=39 // loop_header_branch
                %296 = sbr.rel (%p294) target = $region47
              $region44: #{multimodal_generator.2} parent=39 // loop_body
                %v300 = vld [vmem:[%s298] sm:$0xf]
                %301 = vst [vmem:[%s299] sm:$0xf] %v300
                %v302 = vld [vmem:[%s298 + $0x8] sm:$0xf]
                %303 = vst [vmem:[%s299 + $0x4] sm:$0xf] %v302
                %v304 = vld [vmem:[%s298 + $0x10] sm:$0xf]
                %305 = vst [vmem:[%s299 + $0x8] sm:$0xf] %v304
                %v306 = vld [vmem:[%s298 + $0x18] sm:$0xf]
                %307 = vst [vmem:[%s299 + $0xc] sm:$0xf] %v306
                %v308 = vld [vmem:[%s298 + $0x20] sm:$0xf]
                %309 = vst [vmem:[%s299 + $0x10] sm:$0xf] %v308
                %v310 = vld [vmem:[%s298 + $0x28] sm:$0xf]
                %311 = vst [vmem:[%s299 + $0x14] sm:$0xf] %v310
                %v312 = vld [vmem:[%s298 + $0x30] sm:$0xf]
                %313 = vst [vmem:[%s299 + $0x18] sm:$0xf] %v312
                %v314 = vld [vmem:[%s298 + $0x38] sm:$0xf]
                %315 = vst [vmem:[%s299 + $0x1c] sm:$0xf] %v314
                %v316 = vld [vmem:[%s298 + $0x40] sm:$0xf]
                %317 = vst [vmem:[%s299 + $0x20] sm:$0xf] %v316
                %v318 = vld [vmem:[%s298 + $0x48] sm:$0xf]
                %319 = vst [vmem:[%s299 + $0x24] sm:$0xf] %v318
                %v320 = vld [vmem:[%s298 + $0x50] sm:$0xf]
                %321 = vst [vmem:[%s299 + $0x28] sm:$0xf] %v320
                %v322 = vld [vmem:[%s298 + $0x58] sm:$0xf]
                %323 = vst [vmem:[%s299 + $0x2c] sm:$0xf] %v322
                %v324 = vld [vmem:[%s298 + $0x60] sm:$0xf]
                %325 = vst [vmem:[%s299 + $0x30] sm:$0xf] %v324
                %v326 = vld [vmem:[%s298 + $0x68] sm:$0xf]
                %327 = vst [vmem:[%s299 + $0x34] sm:$0xf] %v326
                %v328 = vld [vmem:[%s298 + $0x70] sm:$0xf]
                %329 = vst [vmem:[%s299 + $0x38] sm:$0xf] %v328
                %v330 = vld [vmem:[%s298 + $0x78] sm:$0xf]
                %331 = vst [vmem:[%s299 + $0x3c] sm:$0xf] %v330
              $region45: #{multimodal_generator.2} parent=39 // loop_footer
                %s297 = sadd.s32 1, %s293
              $region46: #{multimodal_generator.2} parent=39 // loop_footer_branch
                %292 = sbr.rel target = $region42
              $region47: #{multimodal_generator.2} parent=39 // loop_exit
                _
            $region40: #{multimodal_generator.2} parent=31 // pred_fallthru
              _
          $region32: #{multimodal_generator.2} parent=27 // pred_fallthru
            _
          %383 = vnop
        $region28: #{multimodal_generator.2} parent=15 // pred_fallthru
          _
        // Predicated region
        $region66: #{multimodal_generator.2} parent=15 // pred_check
          %p384 = pneg %p127
        $region67: #{multimodal_generator.2} parent=15 // pred_check_branch
          %386 = sbr.rel (%p384) target = $region69
        $region68: #{multimodal_generator.2} parent=15 // pred_region
          %s387 = sand.u32 %s117, 1
          %s388 = scalar_lea.sflag [#allocation6], %s387
          %s389 = sand.u32 %s117, 1
          %s390 = smul.addr %s389, 64
          %s391 = scalar_lea.vmem [#allocation5], %s390
          %s393 = ssub.s32 1024, 1024
          %394 = vsyncadd %s388, %s393
          %s395 = smul.addr %s24, 64
          %s396 = scalar_lea.hbm %s3, %s395
          %s397 = sshll.u32 %s391, 4
          %s398 = int_to_ptr.vmem [resolvable:$true] %s397
          %403 = dma.hbm_to_vmem [thread:$0]  %s396, 1024, %s398, %s388, 128, 64, 4
        $region69: #{multimodal_generator.2} parent=15 // pred_fallthru
          _
        // Predicated region
        $region70: #{multimodal_generator.2} parent=15 // pred_check
          %p404 = pneg %p153
        $region71: #{multimodal_generator.2} parent=15 // pred_check_branch
          %406 = sbr.rel (%p404) target = $region73
        $region72: #{multimodal_generator.2} parent=15 // pred_region
          %p407 = scmp.lt.s32.totalorder %s24, 1
          %s408 = scalar_select %p407, %s24, 1
          %s409 = scalar_lea.vmem %s4, %s408
        $region73: #{multimodal_generator.2} parent=15 // pred_fallthru
          _
        // Predicated region
        $region74: #{multimodal_generator.2} parent=15 // pred_check
          %p410 = pneg %p179
        $region75: #{multimodal_generator.2} parent=15 // pred_check_branch
          %412 = sbr.rel (%p410) target = $region77
        $region76: #{multimodal_generator.2} parent=15 // pred_region
          %p413 = scmp.lt.s32.totalorder %s24, 1
          %s414 = scalar_select %p413, %s24, 1
          %s415 = smul.addr %s414, 2
          %s416 = scalar_lea.vmem %s5, %s415
        $region77: #{multimodal_generator.2} parent=15 // pred_fallthru
          _
      $region16: #{multimodal_generator.2} parent=5 // pred_fallthru
        _
      %p417 = scmp.le.s32.totalorder 1, %s17
      %p418 = scmp.lt.s32.totalorder %s17, 5
      %p419 = pnand %p417, %p418
      %p420 = pneg %p419
      // Predicated region
      $region78: #{multimodal_generator.2} parent=5 // pred_check
        _
      $region79: #{multimodal_generator.2} parent=5 // pred_check_branch
        %422 = sbr.rel (%p419) target = $region81
      $region80: #{multimodal_generator.2} parent=5 // pred_region
        %s423 = ssub.s32 %s17, 1
        %s424 = sand.u32 %s94, 1
        %s425 = sand.u32 %s94, 1
        %s426 = smul.addr %s425, 64
        %s427 = scalar_lea.vmem [#allocation4], %s426
        // Predicated region
        $region82: #{multimodal_generator.2} parent=80 // pred_check
          %p428 = pneg %p107
        $region83: #{multimodal_generator.2} parent=80 // pred_check_branch
          %430 = sbr.rel (%p428) target = $region85
        $region84: #{multimodal_generator.2} parent=80 // pred_region
          _
        $region85: #{multimodal_generator.2} parent=80 // pred_fallthru
          _
        %s431 = sand.u32 %s120, 1
        %s432 = scalar_lea.sflag [#allocation6], %s431
        %s433 = sand.u32 %s120, 1
        %s434 = smul.addr %s433, 64
        %s435 = scalar_lea.vmem [#allocation5], %s434
        // Predicated region
        $region86: #{multimodal_generator.2} parent=80 // pred_check
          %p436 = pneg %p133
        $region87: #{multimodal_generator.2} parent=80 // pred_check_branch
          %438 = sbr.rel (%p436) target = $region89
        $region88: #{multimodal_generator.2} parent=80 // pred_region
          %439 = dma.done %s432, 1024
        $region89: #{multimodal_generator.2} parent=80 // pred_fallthru
          _
        %s440 = smul.u32 2, %s27
        %p441 = scmp.lt.s32.totalorder %s440, 3
        %s442 = scalar_select %p441, %s440, 3
        %s443 = smul.addr %s442, 4
        %s444 = scalar_lea.vmem %s0, %s443
        %p445 = pneg %p55
        %p446 = pneg %p52
        %s447 = smul.u32 2, %s27
        %p448 = scmp.lt.s32.totalorder %s447, 3
        %s449 = scalar_select %p448, %s447, 3
        %s450 = smul.addr %s449, 4
        %s451 = scalar_lea.vmem %s1, %s450
        %p452 = pneg %p81
        %p453 = pneg %p78
        %s454 = sand.u32 %s94, 1
        %s455 = sand.u32 %s94, 1
        %s456 = smul.addr %s455, 64
        %s457 = scalar_lea.vmem [#allocation4], %s456
        %p458 = pneg %p107
        %p459 = pneg %p104
        %s460 = sand.u32 %s120, 1
        %s461 = scalar_lea.sflag [#allocation6], %s460
        %s462 = sand.u32 %s120, 1
        %s463 = smul.addr %s462, 64
        %s464 = scalar_lea.vmem [#allocation5], %s463
        %p465 = pneg %p133
        %p466 = pneg %p130
        %p467 = scmp.lt.s32.totalorder %s26, 1
        %s468 = scalar_select %p467, %s26, 1
        %s469 = scalar_lea.vmem %s4, %s468
        %p470 = pneg %p159
        %p471 = pneg %p156
        %p472 = scmp.lt.s32.totalorder %s26, 1
        %s473 = scalar_select %p472, %s26, 1
        %s474 = smul.addr %s473, 2
        %s475 = scalar_lea.vmem %s5, %s474
        %p476 = pneg %p185
        %p477 = pneg %p182
        %p478 = pneg %p213
        %p479 = pneg %p210
        %s480 = sand.u32 %s200, 1
        %s481 = sand.u32 %s200, 1
        %s482 = smul.addr %s481, 8
        %s483 = scalar_lea.vmem [#allocation7], %s482
        %p484 = pneg %p239
        %p485 = pneg %p236
        %s486 = smul.u32 2, %s27
        %p487 = scmp.lt.s32.totalorder %s486, 3
        %s488 = scalar_select %p487, %s486, 3
        %s489 = smul.addr %s488, 8
        %s490 = scalar_lea.vmem %s7, %s489
        %s491 = smul.u32 2, %s27
        %p492 = scmp.lt.s32.totalorder %s491, 3
        %s493 = scalar_select %p492, %s491, 3
        %s494 = smul.addr %s493, 4
        %s495 = scalar_lea.vmem %s0, %s494
        %s496 = smul.u32 2, %s27
        %s497 = smul.u32 2, %s27
        %p498 = scmp.lt.s32.totalorder %s497, 3
        %s499 = scalar_select %p498, %s497, 3
        %s500 = smul.addr %s499, 4
        %s501 = scalar_lea.vmem %s1, %s500
        %s502 = smul.u32 2, %s27
        %p503 = scmp.lt.s32.totalorder %s26, 1
        %s504 = scalar_select %p503, %s26, 1
        %s505 = scalar_lea.vmem %s4, %s504
        %p506 = scmp.lt.s32.totalorder %s26, 1
        %s507 = scalar_select %p506, %s26, 1
        %s508 = smul.addr %s507, 2
        %s509 = scalar_lea.vmem %s5, %s508
        %s510 = smul.u32 2, %s27
        %s511 = smul.u32 2, %s27
        %p512 = scmp.lt.s32.totalorder %s511, 3
        %s513 = scalar_select %p512, %s511, 3
        %s514 = smul.addr %s513, 8
        %s515 = scalar_lea.vmem %s7, %s514
        %s516 = smul.u32 2, %s27
        %v518 = vld [vmem:[%s495] sm:$0xf]
        %v519 = vld [vmem:[%s495 + $0x4] sm:$0xf]
        %v520 = vld [vmem:[%s427] sm:$0xf]
        %v521 = vld [vmem:[%s427 + $0x4] sm:$0xf]
        %v522 = vld [vmem:[%s427 + $0x8] sm:$0xf]
        %v523 = vld [vmem:[%s427 + $0xc] sm:$0xf]
        %v524 = vld [vmem:[%s427 + $0x10] sm:$0xf]
        %v525 = vld [vmem:[%s427 + $0x14] sm:$0xf]
        %v526 = vld [vmem:[%s427 + $0x18] sm:$0xf]
        %v527 = vld [vmem:[%s427 + $0x1c] sm:$0xf]
        %v528 = vld [vmem:[%s427 + $0x20] sm:$0xf]
        %v529 = vld [vmem:[%s427 + $0x24] sm:$0xf]
        %v530 = vld [vmem:[%s427 + $0x28] sm:$0xf]
        %v531 = vld [vmem:[%s427 + $0x2c] sm:$0xf]
        %v532 = vld [vmem:[%s427 + $0x30] sm:$0xf]
        %v533 = vld [vmem:[%s427 + $0x34] sm:$0xf]
        %v534 = vld [vmem:[%s427 + $0x38] sm:$0xf]
        %v535 = vld [vmem:[%s427 + $0x3c] sm:$0xf]
        %v536 = vld [vmem:[%s505] sm:$0x1]
        %v538 = vlaneseq
        %v539 = vshrl.u32 %v538, 7
        %v540 = vsub.s32 0, %v539
        %v541 = vrot.slane %v536, %v540
        %v545 = vunpack.c.l.b16 %v518
        %v546 = vunpack.c.l.b16 %v519
        %v547 = vpack.c.b16 %v546, %v545
        %v565 = vunpack.c.l.b16 %v520
        %v566 = vunpack.c.l.b16 %v521
        %v567 = vunpack.c.l.b16 %v522
        %v568 = vunpack.c.l.b16 %v523
        %v569 = vunpack.c.l.b16 %v524
        %v570 = vunpack.c.l.b16 %v525
        %v571 = vunpack.c.l.b16 %v526
        %v572 = vunpack.c.l.b16 %v527
        %v573 = vunpack.c.l.b16 %v528
        %v574 = vunpack.c.l.b16 %v529
        %v575 = vunpack.c.l.b16 %v530
        %v576 = vunpack.c.l.b16 %v531
        %v577 = vunpack.c.l.b16 %v532
        %v578 = vunpack.c.l.b16 %v533
        %v579 = vunpack.c.l.b16 %v534
        %v580 = vunpack.c.l.b16 %v535
        %v581 = vpack.c.b16 %v566, %v565
        %v582 = vpack.c.b16 %v568, %v567
        %v583 = vpack.c.b16 %v570, %v569
        %v584 = vpack.c.b16 %v572, %v571
        %v585 = vpack.c.b16 %v574, %v573
        %v586 = vpack.c.b16 %v576, %v575
        %v587 = vpack.c.b16 %v578, %v577
        %v588 = vpack.c.b16 %v580, %v579
        %597 = vmatprep.subr.bf16.mxu0 0
        %598 = vmatpush1.bf16.msra.mxu0 %v581
        %599 = vmatprep.subr.bf16.mxu0 0
        %600 = vmatpush1.bf16.msra.mxu0 %v582
        %601 = vmatprep.subr.bf16.mxu0 0
        %602 = vmatpush1.bf16.msra.mxu0 %v583
        %603 = vmatprep.subr.bf16.mxu0 0
        %604 = vmatpush1.bf16.msra.mxu0 %v584
        %605 = vmatprep.subr.bf16.mxu0 0
        %606 = vmatpush1.bf16.msra.mxu0 %v585
        %607 = vmatprep.subr.bf16.mxu0 0
        %608 = vmatpush1.bf16.msra.mxu0 %v586
        %609 = vmatprep.subr.bf16.mxu0 0
        %610 = vmatpush1.bf16.msra.mxu0 %v587
        %611 = vmatprep.subr.bf16.mxu0 0
        %612 = vmatpush1.bf16.msra.mxu0 %v588
        %613 = vmatprep.subr.bf16.mxu0 0
        %614 = vmatpush1.bf16.msra.mxu0 0
        %615 = vmatprep.subr.bf16.mxu0 0
        %616 = vmatpush1.bf16.msra.mxu0 0
        %617 = vmatprep.subr.bf16.mxu0 0
        %618 = vmatpush1.bf16.msra.mxu0 0
        %619 = vmatprep.subr.bf16.mxu0 0
        %620 = vmatpush1.bf16.msra.mxu0 0
        %621 = vmatprep.subr.bf16.mxu0 0
        %622 = vmatpush1.bf16.msra.mxu0 0
        %623 = vmatprep.subr.bf16.mxu0 0
        %624 = vmatpush1.bf16.msra.mxu0 0
        %625 = vmatprep.subr.bf16.mxu0 0
        %626 = vmatpush1.bf16.msra.mxu0 0
        %627 = vmatprep.subr.bf16.mxu0 0
        %628 = vmatpush1.bf16.msra.mxu0 0
        %629 = vmatprep.mubr.bf16.mxu0 0
        %630 = vmatmul.mubr.bf16.gmra.mrb[0].mxu0 %v547
        %v631 = vpop.f32.mrb[0].mxu0
        %v632 = vadd.f32 %v541, %v631
        %v633 = vpop.f32.mrb[0].mxu0
        %v634 = vpop.f32.mrb[0].mxu0
        %v635 = vadd.f32 %v541, %v634
        %v636 = vpop.f32.mrb[0].mxu0
        %637 = vdwg.mxu0
        %v638 = vld [vmem:[%s501] sm:$0xf]
        %v639 = vld [vmem:[%s501 + $0x4] sm:$0xf]
        %v640 = vld [vmem:[%s509] sm:$0x3]
        %v641 = vld [vmem:[%s435] sm:$0xf]
        %v642 = vld [vmem:[%s435 + $0x4] sm:$0xf]
        %v643 = vld [vmem:[%s435 + $0x8] sm:$0xf]
        %v644 = vld [vmem:[%s435 + $0xc] sm:$0xf]
        %v645 = vld [vmem:[%s435 + $0x10] sm:$0xf]
        %v646 = vld [vmem:[%s435 + $0x14] sm:$0xf]
        %v647 = vld [vmem:[%s435 + $0x18] sm:$0xf]
        %v648 = vld [vmem:[%s435 + $0x1c] sm:$0xf]
        %v649 = vld [vmem:[%s435 + $0x20] sm:$0xf]
        %v650 = vld [vmem:[%s435 + $0x24] sm:$0xf]
        %v651 = vld [vmem:[%s435 + $0x28] sm:$0xf]
        %v652 = vld [vmem:[%s435 + $0x2c] sm:$0xf]
        %v653 = vld [vmem:[%s435 + $0x30] sm:$0xf]
        %v654 = vld [vmem:[%s435 + $0x34] sm:$0xf]
        %v655 = vld [vmem:[%s435 + $0x38] sm:$0xf]
        %v656 = vld [vmem:[%s435 + $0x3c] sm:$0xf]
        %v673 = vunpack.c.l.b16 %v641
        %v674 = vunpack.c.l.b16 %v642
        %v675 = vunpack.c.l.b16 %v643
        %v676 = vunpack.c.l.b16 %v644
        %v677 = vunpack.c.l.b16 %v645
        %v678 = vunpack.c.l.b16 %v646
        %v679 = vunpack.c.l.b16 %v647
        %v680 = vunpack.c.l.b16 %v648
        %v681 = vunpack.c.l.b16 %v649
        %v682 = vunpack.c.l.b16 %v650
        %v683 = vunpack.c.l.b16 %v651
        %v684 = vunpack.c.l.b16 %v652
        %v685 = vunpack.c.l.b16 %v653
        %v686 = vunpack.c.l.b16 %v654
        %v687 = vunpack.c.l.b16 %v655
        %v688 = vunpack.c.l.b16 %v656
        %v689 = vpack.c.b16 %v674, %v673
        %v690 = vpack.c.b16 %v676, %v675
        %v691 = vpack.c.b16 %v678, %v677
        %v692 = vpack.c.b16 %v680, %v679
        %v693 = vpack.c.b16 %v682, %v681
        %v694 = vpack.c.b16 %v684, %v683
        %v695 = vpack.c.b16 %v686, %v685
        %v696 = vpack.c.b16 %v688, %v687
        %705 = vmatprep.subr.bf16.mxu0 0
        %706 = vmatpush1.bf16.msra.mxu0 %v689
        %707 = vmatprep.subr.bf16.mxu0 0
        %708 = vmatpush1.bf16.msra.mxu0 %v690
        %709 = vmatprep.subr.bf16.mxu0 0
        %710 = vmatpush1.bf16.msra.mxu0 %v691
        %711 = vmatprep.subr.bf16.mxu0 0
        %712 = vmatpush1.bf16.msra.mxu0 %v692
        %713 = vmatprep.subr.bf16.mxu0 0
        %714 = vmatpush1.bf16.msra.mxu0 %v693
        %715 = vmatprep.subr.bf16.mxu0 0
        %716 = vmatpush1.bf16.msra.mxu0 %v694
        %717 = vmatprep.subr.bf16.mxu0 0
        %718 = vmatpush1.bf16.msra.mxu0 %v695
        %719 = vmatprep.subr.bf16.mxu0 0
        %720 = vmatpush1.bf16.msra.mxu0 %v696
        %721 = vmatprep.subr.bf16.mxu0 0
        %722 = vmatpush1.bf16.msra.mxu0 0
        %723 = vmatprep.subr.bf16.mxu0 0
        %724 = vmatpush1.bf16.msra.mxu0 0
        %725 = vmatprep.subr.bf16.mxu0 0
        %726 = vmatpush1.bf16.msra.mxu0 0
        %727 = vmatprep.subr.bf16.mxu0 0
        %728 = vmatpush1.bf16.msra.mxu0 0
        %729 = vmatprep.subr.bf16.mxu0 0
        %730 = vmatpush1.bf16.msra.mxu0 0
        %731 = vmatprep.subr.bf16.mxu0 0
        %732 = vmatpush1.bf16.msra.mxu0 0
        %733 = vmatprep.subr.bf16.mxu0 0
        %734 = vmatpush1.bf16.msra.mxu0 0
        %735 = vmatprep.subr.bf16.mxu0 0
        %736 = vmatpush1.bf16.msra.mxu0 0
        %737 = vmatprep.mubr.bf16.mxu0 0
        %738 = vmatmul.mubr.bf16.gmra.mrb[0].mxu0 %v547
        %v739 = vpop.f32.mrb[0].mxu0
        %v740 = vadd.f32 0.0, %v739
        %v741 = vpop.f32.mrb[0].mxu0
        %v742 = vpop.f32.mrb[0].mxu0
        %v743 = vadd.f32 0.0, %v742
        %v744 = vpop.f32.mrb[0].mxu0
        %745 = vdwg.mxu0
        %v748 = vunpack.c.l.b16 %v638
        %v749 = vunpack.c.l.b16 %v639
        %v750 = vpack.c.b16 %v749, %v748
        %vm751 = vcmask 31744
        %v753 = vsel %vm751, %v750, 0
        %vm755 = vcmask 1041408
        %v757 = vsel %vm755, %v640, 0
        %759 = vmatprep.subr.bf16.mxu0 0
        %760 = vmatpush1.bf16.msra.mxu0 %v757
        %761 = vmatprep.subr.bf16.mxu0 0
        %762 = vmatpush1.bf16.msra.mxu0 0
        %763 = vmatprep.subr.bf16.mxu0 0
        %764 = vmatpush1.bf16.msra.mxu0 0
        %765 = vmatprep.subr.bf16.mxu0 0
        %766 = vmatpush1.bf16.msra.mxu0 0
        %767 = vmatprep.subr.bf16.mxu0 0
        %768 = vmatpush1.bf16.msra.mxu0 0
        %769 = vmatprep.subr.bf16.mxu0 0
        %770 = vmatpush1.bf16.msra.mxu0 0
        %771 = vmatprep.subr.bf16.mxu0 0
        %772 = vmatpush1.bf16.msra.mxu0 0
        %773 = vmatprep.subr.bf16.mxu0 0
        %774 = vmatpush1.bf16.msra.mxu0 0
        %775 = vmatprep.subr.bf16.mxu0 0
        %776 = vmatpush1.bf16.msra.mxu0 0
        %777 = vmatprep.subr.bf16.mxu0 0
        %778 = vmatpush1.bf16.msra.mxu0 0
        %779 = vmatprep.subr.bf16.mxu0 0
        %780 = vmatpush1.bf16.msra.mxu0 0
        %781 = vmatprep.subr.bf16.mxu0 0
        %782 = vmatpush1.bf16.msra.mxu0 0
        %783 = vmatprep.subr.bf16.mxu0 0
        %784 = vmatpush1.bf16.msra.mxu0 0
        %785 = vmatprep.subr.bf16.mxu0 0
        %786 = vmatpush1.bf16.msra.mxu0 0
        %787 = vmatprep.subr.bf16.mxu0 0
        %788 = vmatpush1.bf16.msra.mxu0 0
        %789 = vmatprep.subr.bf16.mxu0 0
        %790 = vmatpush1.bf16.msra.mxu0 0
        %791 = vmatprep.mubr.bf16.mxu0 0
        %792 = vmatmul.mubr.bf16.gmra.mrb[0].mxu0 %v753
        %v793 = vpop.f32.mrb[0].mxu0
        %v794 = vadd.f32 %v740, %v793
        %v795 = vpop.f32.mrb[0].mxu0
        %v796 = vpop.f32.mrb[0].mxu0
        %v797 = vadd.f32 %v743, %v796
        %v798 = vpop.f32.mrb[0].mxu0
        %799 = vdwg.mxu0
        %v800 = vxor.u32 %v794, 2147483648
        %v801 = vxor.u32 %v797, 2147483648
        %v802 = vmul.f32 %v800, 1.442695
        %v803 = vpow.pop %v802
        %v804 = vmul.f32 %v801, 1.442695
        %v805 = vpow.pop %v804
        %v806 = vadd.f32 %v803, 1.0
        %v807 = vadd.f32 %v805, 1.0
        %v808 = vrcp.pop %v806
        %v809 = vmul.f32 1.0, %v808
        %v810 = vrcp.pop %v807
        %v811 = vmul.f32 1.0, %v810
        %v812 = vmul.f32 %v632, %v809
        %v813 = vmul.f32 %v635, %v811
        %s814 = smul.u32 %s27, 16
        %p815 = scmp.eq.s32.totalorder %s26, 0
        // Predicated region
        $region90: #{multimodal_generator.2} parent=80 // pred_check
          %p816 = pneg %p815
        $region91: #{multimodal_generator.2} parent=80 // pred_check_branch
          %818 = sbr.rel (%p816) target = $region93
        $region92: #{multimodal_generator.2} parent=80 // pred_region
          %s819 = scalar_lea.vmem [#allocation2], %s814
          %vm820 = vcmask 7168
          %821 = vst.msk [vmem:[%s819] sm:$0xff] %vm820, -inf
          %822 = vst.msk [vmem:[%s819 + $0x8] sm:$0xff] %vm820, -inf
          %s823 = scalar_lea.vmem [#allocation3], %s814
          %824 = vst.msk [vmem:[%s823] sm:$0xff] %vm820, 0.0
          %825 = vst.msk [vmem:[%s823 + $0x8] sm:$0xff] %vm820, 0.0
        $region93: #{multimodal_generator.2} parent=80 // pred_fallthru
          _
        %s826 = scalar_lea.vmem [#allocation2], %s814
        %v827 = vld [vmem:[%s826] sm:$0xff]
        %v828 = vld [vmem:[%s826 + $0x8] sm:$0xff]
        %829 = vmax.xlane.f32.xlu0 %v812
        %v830 = vpop.xlane.xlu0 %829
        %831 = vmax.xlane.f32.xlu0 %v813
        %v832 = vpop.xlane.xlu0 %831
        %v833 = vmax.f32 %v827, %v830
        %v834 = vmax.f32 %v828, %v832
        %s835 = scalar_lea.vmem [#allocation3], %s814
        %v836 = vld [vmem:[%s835] sm:$0xff]
        %v837 = vld [vmem:[%s835 + $0x8] sm:$0xff]
        %v838 = vsub.f32 %v827, %v833
        %v839 = vsub.f32 %v828, %v834
        %v840 = vmul.f32 %v838, 1.442695
        %v841 = vpow.pop %v840
        %v842 = vmul.f32 %v839, 1.442695
        %v843 = vpow.pop %v842
        %v844 = vmul.f32 %v836, %v841
        %v845 = vmul.f32 %v837, %v843
        %847 = vset.pattern.permute.xlu0 0
        %848 = vperm.xlu0 %847, %v833
        %v849 = vpop.permute.xlu0 %848
        %852 = vset.pattern.permute.xlu0 0
        %853 = vperm.xlu0 %852, %v834
        %v854 = vpop.permute.xlu0 %853
        %v856 = vsub.f32 %v812, %v849
        %v857 = vsub.f32 %v813, %v854
        %v858 = vmul.f32 %v856, 1.442695
        %v859 = vpow.pop %v858
        %v860 = vmul.f32 %v857, 1.442695
        %v861 = vpow.pop %v860
        %862 = vadd.xlane.f32.xlu0 %v859
        %v863 = vpop.xlane.xlu0 %862
        %864 = vadd.xlane.f32.xlu0 %v861
        %v865 = vpop.xlane.xlu0 %864
        %v866 = vadd.f32 %v844, %v863
        %v867 = vadd.f32 %v845, %v865
        %vm868 = vcmask 7168
        %869 = vst.msk [vmem:[%s826] sm:$0xff] %vm868, %v833
        %870 = vst.msk [vmem:[%s826 + $0x8] sm:$0xff] %vm868, %v834
        %871 = vst.msk [vmem:[%s835] sm:$0xff] %vm868, %v866
        %872 = vst.msk [vmem:[%s835 + $0x8] sm:$0xff] %vm868, %v867
        %v873 = vpack.c.bf16 %v813, %v812
        %v875 = vunpack.c.l.b16 %v873
        %v876 = vunpack.c.h.b16 %v873
        %v877 = vpack.c.b16 %v875, %v875
        %v878 = vpack.c.b16 %v876, %v876
        %881 = vst [vmem:[%s483] sm:$0xf] %v877
        %882 = vst [vmem:[%s483 + $0x4] sm:$0xf] %v878
        %p883 = scmp.eq.s32.totalorder %s26, 1
        // Predicated region
        $region94: #{multimodal_generator.2} parent=80 // pred_check
          %p884 = pneg %p883
        $region95: #{multimodal_generator.2} parent=80 // pred_check_branch
          %886 = sbr.rel (%p884) target = $region97
        $region96: #{multimodal_generator.2} parent=80 // pred_region
          %v887 = vlog2.pop %v866
          %v888 = vmul.f32 %v887, 0.6931472
          %v889 = vlog2.pop %v867
          %v890 = vmul.f32 %v889, 0.6931472
          %v891 = vadd.f32 %v833, %v888
          %v892 = vadd.f32 %v834, %v890
          %893 = vst.msk [vmem:[%s515] sm:$0xff] %vm868, %v891
          %894 = vst.msk [vmem:[%s515 + $0x8] sm:$0xff] %vm868, %v892
        $region97: #{multimodal_generator.2} parent=80 // pred_fallthru
          _
        %s895 = sand.u32 %s200, 1
        %s896 = sand.u32 %s200, 1
        %s897 = smul.addr %s896, 8
        %s898 = scalar_lea.vmem [#allocation7], %s897
        %s899 = smul.u32 2, %s27
        %p900 = scmp.lt.s32.totalorder %s899, 3
        %s901 = scalar_select %p900, %s899, 3
        %s902 = smul.addr %s901, 8
        %s903 = scalar_lea.vmem %s7, %s902
        // Predicated region
        $region98: #{multimodal_generator.2} parent=80 // pred_check
          %p904 = pneg %p210
        $region99: #{multimodal_generator.2} parent=80 // pred_check_branch
          %906 = sbr.rel (%p904) target = $region101
        $region100: #{multimodal_generator.2} parent=80 // pred_region
          %s907 = smul.u32 2, %s27
          %s908 = smul.addr %s907, 2
          %s909 = sadd.s32 %s26, %s908
          %s910 = smul.addr %s909, 4
          %s911 = scalar_lea.vmem %s6, %s910
          // Predicated region
          $region102: #{multimodal_generator.2} parent=100 // pred_check
            _
          $region103: #{multimodal_generator.2} parent=100 // pred_check_branch
            %913 = sbr.rel (0) target = $region105
          $region104: #{multimodal_generator.2} parent=100 // pred_region
            // Predicated region
            $region106: #{multimodal_generator.2} parent=104 // pred_check
              _
            $region107: #{multimodal_generator.2} parent=104 // pred_check_branch
              %915 = sbr.rel target = $region109
            $region108: #{multimodal_generator.2} parent=104 // pred_region
              // Predicated region
              $region121: #{multimodal_generator.2} parent=108 // pred_check
                _
              $region122: #{multimodal_generator.2} parent=108 // pred_check_branch
                %932 = sbr.rel (0) target = $region124
              $region123: #{multimodal_generator.2} parent=108 // pred_region
                loop: start=0, step=1, limit=1
                $region125: #{multimodal_generator.2} parent=123 // loop_pre_header
                  _
                $region126: #{multimodal_generator.2} parent=123 // loop_header
                  %s934 = sphi 0, %s938
                  %p935 = scmp.ge.s32.totalorder %s934, 1
                  %s939 = sphi %s898, %s898
                  %s940 = sphi %s911, %s911
                $region127: #{multimodal_generator.2} parent=123 // loop_header_branch
                  %937 = sbr.rel (%p935) target = $region131
                $region128: #{multimodal_generator.2} parent=123 // loop_body
                  _
                $region129: #{multimodal_generator.2} parent=123 // loop_footer
                  %s938 = sadd.s32 1, %s934
                $region130: #{multimodal_generator.2} parent=123 // loop_footer_branch
                  %933 = sbr.rel target = $region126
                $region131: #{multimodal_generator.2} parent=123 // loop_exit
                  _
                loop: start=0, step=1, limit=1
                $region132: #{multimodal_generator.2} parent=123 // loop_pre_header
                  _
                $region133: #{multimodal_generator.2} parent=123 // loop_header
                  %s943 = sphi 0, %s947
                  %p944 = scmp.ge.s32.totalorder %s943, 1
                  %s948 = sphi %s898, %s898
                  %s949 = sphi %s911, %s911
                $region134: #{multimodal_generator.2} parent=123 // loop_header_branch
                  %946 = sbr.rel (%p944) target = $region138
                $region135: #{multimodal_generator.2} parent=123 // loop_body
                  %v950 = vld [vmem:[%s948] sm:$0xf]
                  %951 = vst [vmem:[%s949] sm:$0xf] %v950
                  %v952 = vld [vmem:[%s948 + $0x4] sm:$0xf]
                  %953 = vst [vmem:[%s949 + $0x8] sm:$0xf] %v952
                $region136: #{multimodal_generator.2} parent=123 // loop_footer
                  %s947 = sadd.s32 1, %s943
                $region137: #{multimodal_generator.2} parent=123 // loop_footer_branch
                  %942 = sbr.rel target = $region133
                $region138: #{multimodal_generator.2} parent=123 // loop_exit
                  _
              $region124: #{multimodal_generator.2} parent=108 // pred_fallthru
                _
            $region109: #{multimodal_generator.2} parent=104 // pred_fallthru
              _
            // Predicated region
            $region110: #{multimodal_generator.2} parent=104 // pred_check
              _
            $region111: #{multimodal_generator.2} parent=104 // pred_check_branch
              %917 = sbr.rel (0) target = $region113
            $region112: #{multimodal_generator.2} parent=104 // pred_region
              loop: start=0, step=1, limit=1
              $region114: #{multimodal_generator.2} parent=112 // loop_pre_header
                _
              $region115: #{multimodal_generator.2} parent=112 // loop_header
                %s920 = sphi 0, %s924
                %p921 = scmp.ge.s32.totalorder %s920, 1
                %s925 = sphi %s898, %s898
                %s926 = sphi %s911, %s911
              $region116: #{multimodal_generator.2} parent=112 // loop_header_branch
                %923 = sbr.rel (%p921) target = $region120
              $region117: #{multimodal_generator.2} parent=112 // loop_body
                %v927 = vld [vmem:[%s925] sm:$0xf]
                %928 = vst [vmem:[%s926] sm:$0xf] %v927
                %v929 = vld [vmem:[%s925 + $0x4] sm:$0xf]
                %930 = vst [vmem:[%s926 + $0x8] sm:$0xf] %v929
              $region118: #{multimodal_generator.2} parent=112 // loop_footer
                %s924 = sadd.s32 1, %s920
              $region119: #{multimodal_generator.2} parent=112 // loop_footer_branch
                %919 = sbr.rel target = $region115
              $region120: #{multimodal_generator.2} parent=112 // loop_exit
                _
            $region113: #{multimodal_generator.2} parent=104 // pred_fallthru
              _
          $region105: #{multimodal_generator.2} parent=100 // pred_fallthru
            _
          %954 = vnop
        $region101: #{multimodal_generator.2} parent=80 // pred_fallthru
          _
        // Predicated region
        $region139: #{multimodal_generator.2} parent=80 // pred_check
          %p955 = pneg %p236
        $region140: #{multimodal_generator.2} parent=80 // pred_check_branch
          %957 = sbr.rel (%p955) target = $region142
        $region141: #{multimodal_generator.2} parent=80 // pred_region
          %s958 = smul.u32 2, %s27
        $region142: #{multimodal_generator.2} parent=80 // pred_fallthru
          _
      $region81: #{multimodal_generator.2} parent=5 // pred_fallthru
        _
      %p959 = scmp.le.s32.totalorder 2, %s17
      // Predicated region
      $region143: #{multimodal_generator.2} parent=5 // pred_check
        %p960 = pneg %p959
      $region144: #{multimodal_generator.2} parent=5 // pred_check_branch
        %962 = sbr.rel (%p960) target = $region146
      $region145: #{multimodal_generator.2} parent=5 // pred_region
        %s963 = ssub.s32 %s17, 2
        // Predicated region
        $region147: #{multimodal_generator.2} parent=145 // pred_check
          %p964 = pneg %p216
        $region148: #{multimodal_generator.2} parent=145 // pred_check_branch
          %966 = sbr.rel (%p964) target = $region150
        $region149: #{multimodal_generator.2} parent=145 // pred_region
          %s967 = sand.u32 %s201, 1
          %s968 = sand.u32 %s201, 1
          %s969 = smul.addr %s968, 8
          %s970 = scalar_lea.vmem [#allocation7], %s969
        $region150: #{multimodal_generator.2} parent=145 // pred_fallthru
          _
        // Predicated region
        $region151: #{multimodal_generator.2} parent=145 // pred_check
          %p971 = pneg %p242
        $region152: #{multimodal_generator.2} parent=145 // pred_check_branch
          %973 = sbr.rel (%p971) target = $region154
        $region153: #{multimodal_generator.2} parent=145 // pred_region
          %s974 = smul.u32 2, %s29
          %p975 = scmp.lt.s32.totalorder %s974, 3
          %s976 = scalar_select %p975, %s974, 3
          %s977 = smul.addr %s976, 8
          %s978 = scalar_lea.vmem %s7, %s977
        $region154: #{multimodal_generator.2} parent=145 // pred_fallthru
          _
      $region146: #{multimodal_generator.2} parent=5 // pred_fallthru
        _
    $region6: #{multimodal_generator.2} parent=1 // loop_footer
      %s21 = sadd.s32 1, %s17
    $region7: #{multimodal_generator.2} parent=1 // loop_footer_branch
      %16 = sbr.rel target = $region3
    $region8: #{multimodal_generator.2} parent=1 // loop_exit
      _
    %979 = vsyncpa [#allocation6], 1
    %s980 = scalar_lea.sflag [#allocation6], 1
    %981 = vsyncpa %s980, 1

</llo_original>
